<compile_context>
chip_gen: v6e
topology: v6e:2x2x1
jax: 0.10.0
libtpu: 0.0.40
codegen_flags: <defaults>
</compile_context>

<pallas_src>
import functools

import numpy as np
import jax
import jax.numpy as jnp
from jax import lax
from jax.experimental import pallas as pl
from jax.experimental.pallas import tpu as pltpu

NEG_SLOPE = 0.01  # nn.LeakyReLU default


# ---------------------------------------------------------------------------
# The single fused Pallas kernel: ~7 lane-dense matmuls, all VMEM resident.
# ---------------------------------------------------------------------------
def _fused_kernel(cols1_ref, w1_ref, b1_ref,
                  spread_ref, mask_ref, msum_ref,
                  w2_ref, b2_ref, w3_ref, b3_ref, w4_ref, b4_ref,
                  x2_ref, wd_ref, bd_ref,
                  out_ref):
    dot = functools.partial(jnp.dot, preferred_element_type=jnp.float32)
    bf16 = jnp.bfloat16

    def leaky(v):  # valid since 0 < slope < 1
        return jnp.maximum(v, NEG_SLOPE * v)

    # conv1 as im2col matmul: (N*49, 256) @ (256, 16) + b1, LeakyReLU
    a1 = leaky(dot(cols1_ref[...], w1_ref[...]) + b1_ref[...]).astype(bf16)

    # (N*49, 16) -> (N, 784) per-sample flatten, done with constant matmuls:
    #   spread copies channels into every spatial column block, mask keeps only
    #   the block matching the row's spatial position, msum sums each sample's
    #   49 rows (exactly one non-zero contribution per output element).
    a1s = dot(a1, spread_ref[...]) * mask_ref[...]           # (N*49, 784)
    a1f = dot(msum_ref[...], a1s.astype(bf16))               # (N, 784)

    # conv2..conv4, each a single dense matmul against a pre-combined weight.
    a2 = leaky(dot(a1f.astype(bf16), w2_ref[...]) + b2_ref[...])   # (N, 128)
    a3 = leaky(dot(a2.astype(bf16), w3_ref[...]) + b3_ref[...])    # (N, 256)
    # conv4's columns are ordered c*4 + s  == torch.flatten(NCHW) order.
    a4 = leaky(dot(a3.astype(bf16), w4_ref[...]) + b4_ref[...])    # (N, 512)

    # inputDense1:  x2 @ Wd + bd  (kept f32, tiny)
    dense = dot(x2_ref[...], wd_ref[...]) + bd_ref[...]            # (N, 64)

    feat_dim = a4.shape[-1]
    out_ref[:, :feat_dim] = a4.astype(out_ref.dtype)
    out_ref[:, feat_dim:] = dense.astype(out_ref.dtype)


# ---------------------------------------------------------------------------
# Host-side constant builders (run once, off the hot path)
# ---------------------------------------------------------------------------
def _combined_conv_matrix(w, ih, iw, sh, sw, ph, pw, out_order):
    """Fold a conv layer (OIHW weight, input ih x iw, stride, padding) into a
    dense matrix M so that y_flat = x_flat @ M, with x_flat columns ordered
    (in_y*iw + in_x, in_channel).  Output columns are (out_spatial, out_ch)
    for out_order == "sc" and (out_ch, out_spatial) -- torch.flatten(NCHW)
    order -- for "cs"."""
    oc, ic, kh, kw = w.shape
    oh = (ih + 2 * ph - kh) // sh + 1
    ow = (iw + 2 * pw - kw) // sw + 1
    m = np.zeros((ih * iw * ic, oh * ow * oc), np.float32)
    for oy in range(oh):
        for ox in range(ow):
            so = oy * ow + ox
            for i in range(kh):
                for j in range(kw):
                    y = oy * sh - ph + i
                    x = ox * sw - pw + j
                    if not (0 <= y < ih and 0 <= x < iw):
                        continue  # padding position -> contributes zero
                    si = y * iw + x
                    for ci in range(ic):
                        row = si * ic + ci
                        if out_order == "sc":
                            m[row, so * oc:(so + 1) * oc] += w[:, ci, i, j]
                        else:  # "cs"
                            m[row, so::oh * ow] += w[:, ci, i, j]
    return m, (oh, ow)


# ---------------------------------------------------------------------------
# Parameters (deterministic, synthetic) + one-time preparation
# ---------------------------------------------------------------------------
def init_params(key):
    ks = jax.random.split(key, 10)

    def w(k, shape, scale=0.05):
        return (scale * jax.random.normal(k, shape)).astype(jnp.float32)

    return {
        "conv1_w": w(ks[0], (16, 4, 8, 8)),   "conv1_b": w(ks[1], (16,)),
        "conv2_w": w(ks[2], (32, 16, 4, 4)),  "conv2_b": w(ks[3], (32,)),
        "conv3_w": w(ks[4], (64, 32, 3, 3)),  "conv3_b": w(ks[5], (64,)),
        "conv4_w": w(ks[6], (128, 64, 3, 3)), "conv4_b": w(ks[7], (128,)),
        "dense1_w": w(ks[8], (64, 4)),        "dense1_b": w(ks[9], (64,)),
    }


def prepare(params, batch, in_hw=(32, 32)):
    """Pre-combine weights once so the per-step forward is ~7 matmuls."""
    f32 = np.float32
    bf16 = jnp.bfloat16
    h, w = in_hw

    w1 = np.asarray(params["conv1_w"], f32)           # (16, 4, 8, 8)
    oc1, cin, kh, kw = w1.shape
    o1h, o1w = (h - kh) // 4 + 1, (w - kw) // 4 + 1
    s1 = o1h * o1w                                      # 49

    # Identity gather kernel for conv1 im2col (column order = (c, kh, kw),
    # matching PyTorch's weight.reshape(OC, C*KH*KW)).
    im2col_k = np.eye(cin * kh * kw, dtype=f32).reshape(cin * kh * kw, cin, kh, kw)

    # Combined conv2/3/4 matrices (batch independent).
    w2c, (o2h, o2w) = _combined_conv_matrix(
        np.asarray(params["conv2_w"], f32), o1h, o1w, 4, 4, 1, 1, "sc")
    w3c, (o3h, o3w) = _combined_conv_matrix(
        np.asarray(params["conv3_w"], f32), o2h, o2w, 1, 1, 1, 1, "sc")
    w4c, (o4h, o4w) = _combined_conv_matrix(
        np.asarray(params["conv4_w"], f32), o3h, o3w, 1, 1, 1, 1, "cs")

    # Flatten helpers for the conv1 -> conv2 boundary.
    spread = np.kron(np.ones((1, s1), f32), np.eye(oc1, dtype=f32))   # (16, 784)
    mask = np.tile(np.kron(np.eye(s1, dtype=f32), np.ones((1, oc1), f32)),
                   (batch, 1))                                         # (N*49, 784)
    msum = np.kron(np.eye(batch, dtype=f32), np.ones((1, s1), f32))    # (N, N*49)

    return {
        "im2col_k": jnp.asarray(im2col_k),                             # wrapper only
        "w1": jnp.asarray(w1.reshape(oc1, -1).T, dtype=bf16),          # (256, 16)
        "b1": jnp.asarray(np.asarray(params["conv1_b"], f32).reshape(1, -1)),
        "spread": jnp.asarray(spread, dtype=bf16),
        "mask": jnp.asarray(mask),                                     # f32 0/1
        "msum": jnp.asarray(msum, dtype=bf16),
        "w2c": jnp.asarray(w2c, dtype=bf16),                           # (784, 128)
        "b2": jnp.asarray(np.tile(np.asarray(params["conv2_b"], f32),
                                  o2h * o2w).reshape(1, -1)),
        "w3c": jnp.asarray(w3c, dtype=bf16),                           # (128, 256)
        "b3": jnp.asarray(np.tile(np.asarray(params["conv3_b"], f32),
                                  o3h * o3w).reshape(1, -1)),
        "w4c": jnp.asarray(w4c, dtype=bf16),                           # (256, 512)
        "b4": jnp.asarray(np.repeat(np.asarray(params["conv4_b"], f32),
                                    o4h * o4w).reshape(1, -1)),
        "wd": jnp.asarray(np.asarray(params["dense1_w"], f32).T),      # (4, 64)
        "bd": jnp.asarray(np.asarray(params["dense1_b"], f32).reshape(1, -1)),
    }


# ---------------------------------------------------------------------------
# Forward pass matching Common.forward(x1, x2) — one fused pallas_call.
# ---------------------------------------------------------------------------
@jax.jit
def common_forward(prep, x1, x2):
    batch = x1.shape[0]

    # conv1 patch extraction: ONE identity-kernel XLA conv (explicit (c,kh,kw)
    # column order) + a reshape.  Cast to bf16 so the kernel's MXU operand is
    # half the DMA bytes.
    patches = lax.conv_general_dilated(
        x1, prep["im2col_k"], window_strides=(4, 4), padding="VALID",
        dimension_numbers=("NCHW", "OIHW", "NHWC"))
    n, o1h, o1w, kc = patches.shape
    cols1 = patches.reshape(n * o1h * o1w, kc).astype(jnp.bfloat16)

    # prepare() bakes the batch into the flatten helpers; fail loudly if reused
    # with a different batch / input size.
    assert prep["msum"].shape == (batch, batch * o1h * o1w), (
        "prepare() was built for a different batch size / input spatial size")

    inputs = [cols1, prep["w1"], prep["b1"],
              prep["spread"], prep["mask"], prep["msum"],
              prep["w2c"], prep["b2"], prep["w3c"], prep["b3"],
              prep["w4c"], prep["b4"],
              x2, prep["wd"], prep["bd"]]

    feat_dim = prep["w4c"].shape[1]            # 512
    out_dim = feat_dim + prep["wd"].shape[1]   # 576

    def full_spec(a):
        nd = a.ndim
        return pl.BlockSpec(a.shape, lambda i, _nd=nd: (0,) * _nd)

    rows1 = cols1.shape[0]
    flops = 2 * (rows1 * cols1.shape[1] * prep["w1"].shape[1]
                 + rows1 * prep["w1"].shape[1] * prep["spread"].shape[1]
                 + batch * rows1 * prep["spread"].shape[1]
                 + batch * prep["w2c"].shape[0] * prep["w2c"].shape[1]
                 + batch * prep["w3c"].shape[0] * prep["w3c"].shape[1]
                 + batch * prep["w4c"].shape[0] * prep["w4c"].shape[1]
                 + batch * prep["wd"].shape[0] * prep["wd"].shape[1])
    bytes_accessed = int(sum(int(np.prod(a.shape)) * a.dtype.itemsize
                             for a in inputs) + batch * out_dim * 4)

    return pl.pallas_call(
        _fused_kernel,
        out_shape=jax.ShapeDtypeStruct((batch, out_dim), jnp.float32),
        grid=(1,),
        in_specs=[full_spec(a) for a in inputs],
        out_specs=pl.BlockSpec((batch, out_dim), lambda i: (0, 0)),
        compiler_params=pltpu.CompilerParams(
            dimension_semantics=("arbitrary",)),
        cost_estimate=pl.CostEstimate(flops=int(flops), transcendentals=0,
                                      bytes_accessed=bytes_accessed),
    )(*inputs)


# ---------------------------------------------------------------------------
# Pure-JAX reference (for the built-in correctness check)
# ---------------------------------------------------------------------------
def reference_forward(params, x1, x2):
    def conv(x, w, b, stride, pad):
        y = lax.conv_general_dilated(
            x, w, window_strides=stride,
            padding=((pad[0], pad[0]), (pad[1], pad[1])),
            dimension_numbers=("NCHW", "OIHW", "NCHW"))
        y = y + b.reshape(1, -1, 1, 1)
        return jnp.where(y >= 0, y, NEG_SLOPE * y)

    f = conv(x1, params["conv1_w"], params["conv1_b"], (4, 4), (0, 0))
    f = conv(f, params["conv2_w"], params["conv2_b"], (4, 4), (1, 1))
    f = conv(f, params["conv3_w"], params["conv3_b"], (1, 1), (1, 1))
    f = conv(f, params["conv4_w"], params["conv4_b"], (1, 1), (1, 1))
    feat = f.reshape(f.shape[0], -1)
    dense = x2 @ params["dense1_w"].T + params["dense1_b"]
    return jnp.concatenate([feat, dense], axis=1)


if __name__ == "__main__":
    key = jax.random.PRNGKey(0)
    kx1, kx2, kp = jax.random.split(key, 3)

    # x1: (2,4,32,32) -> conv1 (2,16,7,7) -> conv2 (2,32,2,2)
    #                 -> conv3 (2,64,2,2) -> conv4 (2,128,2,2) -> flatten 512
    # x2: (2,4) -> Linear -> (2,64);  output: (2, 576)
    batch = 2
    x1 = jax.random.normal(kx1, (batch, 4, 32, 32), dtype=jnp.float32)
    x2 = jax.random.normal(kx2, (batch, 4), dtype=jnp.float32)

    params = init_params(kp)
    prep = prepare(params, batch, in_hw=(32, 32))

    out = jax.block_until_ready(common_forward(prep, x1, x2))
    assert out.shape == (batch, 2 * 2 * 128 + 64), out.shape
    assert out.dtype == jnp.float32

    ref = jax.block_until_ready(jax.jit(reference_forward)(params, x1, x2))
    max_err = float(jnp.max(jnp.abs(out - ref)))
    # bf16 MXU operands (f32 accumulation): tolerance covers bf16 rounding.
    assert max_err < 2e-2, f"max abs error vs reference: {max_err}"

    print("KERNEL_OK")
</pallas_src>

<mosaic_0001>
module attributes {stable_mosaic.version = 11 : i64} {
  func.func @_fused_kernel(%arg0: i32, %arg1: memref<98x256xbf16, #tpu.memory_space<vmem>>, %arg2: memref<256x16xbf16, #tpu.memory_space<vmem>>, %arg3: memref<1x16xf32, #tpu.memory_space<vmem>>, %arg4: memref<16x784xbf16, #tpu.memory_space<vmem>>, %arg5: memref<98x784xf32, #tpu.memory_space<vmem>>, %arg6: memref<2x98xbf16, #tpu.memory_space<vmem>>, %arg7: memref<784x128xbf16, #tpu.memory_space<vmem>>, %arg8: memref<1x128xf32, #tpu.memory_space<vmem>>, %arg9: memref<128x256xbf16, #tpu.memory_space<vmem>>, %arg10: memref<1x256xf32, #tpu.memory_space<vmem>>, %arg11: memref<256x512xbf16, #tpu.memory_space<vmem>>, %arg12: memref<1x512xf32, #tpu.memory_space<vmem>>, %arg13: memref<2x4xf32, #tpu.memory_space<vmem>>, %arg14: memref<4x64xf32, #tpu.memory_space<vmem>>, %arg15: memref<1x64xf32, #tpu.memory_space<vmem>>, %arg16: memref<2x576xf32, #tpu.memory_space<vmem>>) attributes {dimension_semantics = [#tpu.dimension_semantics<arbitrary>], iteration_bounds = array<i64: 1>, scalar_prefetch = 0 : i64, scratch_operands = 0 : i64, tpu.core_type = #tpu.core_type<tc>, window_params = [{pipeline_mode = #tpu.pipeline_mode<synchronous>, transform_indices = @transform_0, window_bounds = array<i64: 98, 256>}, {pipeline_mode = #tpu.pipeline_mode<synchronous>, transform_indices = @transform_1, window_bounds = array<i64: 256, 16>}, {pipeline_mode = #tpu.pipeline_mode<synchronous>, transform_indices = @transform_2, window_bounds = array<i64: 1, 16>}, {pipeline_mode = #tpu.pipeline_mode<synchronous>, transform_indices = @transform_3, window_bounds = array<i64: 16, 784>}, {pipeline_mode = #tpu.pipeline_mode<synchronous>, transform_indices = @transform_4, window_bounds = array<i64: 98, 784>}, {pipeline_mode = #tpu.pipeline_mode<synchronous>, transform_indices = @transform_5, window_bounds = array<i64: 2, 98>}, {pipeline_mode = #tpu.pipeline_mode<synchronous>, transform_indices = @transform_6, window_bounds = array<i64: 784, 128>}, {pipeline_mode = #tpu.pipeline_mode<synchronous>, transform_indices = @transform_7, window_bounds = array<i64: 1, 128>}, {pipeline_mode = #tpu.pipeline_mode<synchronous>, transform_indices = @transform_8, window_bounds = array<i64: 128, 256>}, {pipeline_mode = #tpu.pipeline_mode<synchronous>, transform_indices = @transform_9, window_bounds = array<i64: 1, 256>}, {pipeline_mode = #tpu.pipeline_mode<synchronous>, transform_indices = @transform_10, window_bounds = array<i64: 256, 512>}, {pipeline_mode = #tpu.pipeline_mode<synchronous>, transform_indices = @transform_11, window_bounds = array<i64: 1, 512>}, {pipeline_mode = #tpu.pipeline_mode<synchronous>, transform_indices = @transform_12, window_bounds = array<i64: 2, 4>}, {pipeline_mode = #tpu.pipeline_mode<synchronous>, transform_indices = @transform_13, window_bounds = array<i64: 4, 64>}, {pipeline_mode = #tpu.pipeline_mode<synchronous>, transform_indices = @transform_14, window_bounds = array<i64: 1, 64>}, {pipeline_mode = #tpu.pipeline_mode<synchronous>, transform_indices = @transform_15, window_bounds = array<i64: 2, 576>}]} {
    %c0 = arith.constant 0 : index
    %c0_0 = arith.constant 0 : index
    %0 = vector.load %arg1[%c0, %c0_0] : memref<98x256xbf16, #tpu.memory_space<vmem>>, vector<98x256xbf16>
    %c0_1 = arith.constant 0 : index
    %c0_2 = arith.constant 0 : index
    %1 = vector.load %arg2[%c0_1, %c0_2] : memref<256x16xbf16, #tpu.memory_space<vmem>>, vector<256x16xbf16>
    %cst = arith.constant dense<0.000000e+00> : vector<98x16xf32>
    %2 = tpu.matmul %0, %1, %cst {dimension_numbers = #tpu.dot_dimension_numbers<[1], [0], [0], [1], [0, 0, 1, 1], [], []>} : vector<98x256xbf16>, vector<256x16xbf16>, vector<98x16xf32> -> vector<98x16xf32>
    %c0_3 = arith.constant 0 : index
    %c0_4 = arith.constant 0 : index
    %3 = vector.load %arg3[%c0_3, %c0_4] : memref<1x16xf32, #tpu.memory_space<vmem>>, vector<1x16xf32>
    %4 = vector.broadcast %3 : vector<1x16xf32> to vector<98x16xf32>
    %5 = arith.addf %2, %4 : vector<98x16xf32>
    %cst_5 = arith.constant 0.00999999977 : f32
    %6 = vector.broadcast %cst_5 : f32 to vector<98x16xf32>
    %7 = arith.mulf %6, %5 : vector<98x16xf32>
    %8 = arith.maximumf %5, %7 : vector<98x16xf32>
    %9 = arith.truncf %8 : vector<98x16xf32> to vector<98x16xbf16>
    %c0_6 = arith.constant 0 : index
    %c0_7 = arith.constant 0 : index
    %10 = vector.load %arg4[%c0_6, %c0_7] : memref<16x784xbf16, #tpu.memory_space<vmem>>, vector<16x784xbf16>
    %cst_8 = arith.constant dense<0.000000e+00> : vector<98x784xf32>
    %11 = tpu.matmul %9, %10, %cst_8 {dimension_numbers = #tpu.dot_dimension_numbers<[1], [0], [0], [1], [0, 0, 1, 1], [], []>} : vector<98x16xbf16>, vector<16x784xbf16>, vector<98x784xf32> -> vector<98x784xf32>
    %c0_9 = arith.constant 0 : index
    %c0_10 = arith.constant 0 : index
    %12 = vector.load %arg5[%c0_9, %c0_10] : memref<98x784xf32, #tpu.memory_space<vmem>>, vector<98x784xf32>
    %13 = arith.mulf %11, %12 : vector<98x784xf32>
    %c0_11 = arith.constant 0 : index
    %c0_12 = arith.constant 0 : index
    %14 = vector.load %arg6[%c0_11, %c0_12] : memref<2x98xbf16, #tpu.memory_space<vmem>>, vector<2x98xbf16>
    %15 = arith.truncf %13 : vector<98x784xf32> to vector<98x784xbf16>
    %cst_13 = arith.constant dense<0.000000e+00> : vector<2x784xf32>
    %16 = tpu.matmul %14, %15, %cst_13 {dimension_numbers = #tpu.dot_dimension_numbers<[1], [0], [0], [1], [0, 0, 1, 1], [], []>} : vector<2x98xbf16>, vector<98x784xbf16>, vector<2x784xf32> -> vector<2x784xf32>
    %17 = arith.truncf %16 : vector<2x784xf32> to vector<2x784xbf16>
    %c0_14 = arith.constant 0 : index
    %c0_15 = arith.constant 0 : index
    %18 = vector.load %arg7[%c0_14, %c0_15] : memref<784x128xbf16, #tpu.memory_space<vmem>>, vector<784x128xbf16>
    %cst_16 = arith.constant dense<0.000000e+00> : vector<2x128xf32>
    %19 = tpu.matmul %17, %18, %cst_16 {dimension_numbers = #tpu.dot_dimension_numbers<[1], [0], [0], [1], [0, 0, 1, 1], [], []>} : vector<2x784xbf16>, vector<784x128xbf16>, vector<2x128xf32> -> vector<2x128xf32>
    %c0_17 = arith.constant 0 : index
    %c0_18 = arith.constant 0 : index
    %20 = vector.load %arg8[%c0_17, %c0_18] : memref<1x128xf32, #tpu.memory_space<vmem>>, vector<1x128xf32>
    %21 = vector.broadcast %20 : vector<1x128xf32> to vector<2x128xf32>
    %22 = arith.addf %19, %21 : vector<2x128xf32>
    %cst_19 = arith.constant 0.00999999977 : f32
    %23 = vector.broadcast %cst_19 : f32 to vector<2x128xf32>
    %24 = arith.mulf %23, %22 : vector<2x128xf32>
    %25 = arith.maximumf %22, %24 : vector<2x128xf32>
    %26 = arith.truncf %25 : vector<2x128xf32> to vector<2x128xbf16>
    %c0_20 = arith.constant 0 : index
    %c0_21 = arith.constant 0 : index
    %27 = vector.load %arg9[%c0_20, %c0_21] : memref<128x256xbf16, #tpu.memory_space<vmem>>, vector<128x256xbf16>
    %cst_22 = arith.constant dense<0.000000e+00> : vector<2x256xf32>
    %28 = tpu.matmul %26, %27, %cst_22 {dimension_numbers = #tpu.dot_dimension_numbers<[1], [0], [0], [1], [0, 0, 1, 1], [], []>} : vector<2x128xbf16>, vector<128x256xbf16>, vector<2x256xf32> -> vector<2x256xf32>
    %c0_23 = arith.constant 0 : index
    %c0_24 = arith.constant 0 : index
    %29 = vector.load %arg10[%c0_23, %c0_24] : memref<1x256xf32, #tpu.memory_space<vmem>>, vector<1x256xf32>
    %30 = vector.broadcast %29 : vector<1x256xf32> to vector<2x256xf32>
    %31 = arith.addf %28, %30 : vector<2x256xf32>
    %cst_25 = arith.constant 0.00999999977 : f32
    %32 = vector.broadcast %cst_25 : f32 to vector<2x256xf32>
    %33 = arith.mulf %32, %31 : vector<2x256xf32>
    %34 = arith.maximumf %31, %33 : vector<2x256xf32>
    %35 = arith.truncf %34 : vector<2x256xf32> to vector<2x256xbf16>
    %c0_26 = arith.constant 0 : index
    %c0_27 = arith.constant 0 : index
    %36 = vector.load %arg11[%c0_26, %c0_27] : memref<256x512xbf16, #tpu.memory_space<vmem>>, vector<256x512xbf16>
    %cst_28 = arith.constant dense<0.000000e+00> : vector<2x512xf32>
    %37 = tpu.matmul %35, %36, %cst_28 {dimension_numbers = #tpu.dot_dimension_numbers<[1], [0], [0], [1], [0, 0, 1, 1], [], []>} : vector<2x256xbf16>, vector<256x512xbf16>, vector<2x512xf32> -> vector<2x512xf32>
    %c0_29 = arith.constant 0 : index
    %c0_30 = arith.constant 0 : index
    %38 = vector.load %arg12[%c0_29, %c0_30] : memref<1x512xf32, #tpu.memory_space<vmem>>, vector<1x512xf32>
    %39 = vector.broadcast %38 : vector<1x512xf32> to vector<2x512xf32>
    %40 = arith.addf %37, %39 : vector<2x512xf32>
    %cst_31 = arith.constant 0.00999999977 : f32
    %41 = vector.broadcast %cst_31 : f32 to vector<2x512xf32>
    %42 = arith.mulf %41, %40 : vector<2x512xf32>
    %43 = arith.maximumf %40, %42 : vector<2x512xf32>
    %c0_32 = arith.constant 0 : index
    %c0_33 = arith.constant 0 : index
    %44 = vector.load %arg13[%c0_32, %c0_33] : memref<2x4xf32, #tpu.memory_space<vmem>>, vector<2x4xf32>
    %c0_34 = arith.constant 0 : index
    %c0_35 = arith.constant 0 : index
    %45 = vector.load %arg14[%c0_34, %c0_35] : memref<4x64xf32, #tpu.memory_space<vmem>>, vector<4x64xf32>
    %cst_36 = arith.constant dense<0.000000e+00> : vector<2x64xf32>
    %46 = tpu.matmul %44, %45, %cst_36 {dimension_numbers = #tpu.dot_dimension_numbers<[1], [0], [0], [1], [0, 0, 1, 1], [], []>} : vector<2x4xf32>, vector<4x64xf32>, vector<2x64xf32> -> vector<2x64xf32>
    %c0_37 = arith.constant 0 : index
    %c0_38 = arith.constant 0 : index
    %47 = vector.load %arg15[%c0_37, %c0_38] : memref<1x64xf32, #tpu.memory_space<vmem>>, vector<1x64xf32>
    %48 = vector.broadcast %47 : vector<1x64xf32> to vector<2x64xf32>
    %49 = arith.addf %46, %48 : vector<2x64xf32>
    %c0_39 = arith.constant 0 : index
    %c0_40 = arith.constant 0 : index
    %50 = vector.load %arg16[%c0_39, %c0_40] : memref<2x576xf32, #tpu.memory_space<vmem>>, vector<2x512xf32>
    tpu.vector_store %arg16[%c0_39, %c0_40], %43 {strides = array<i32>} : memref<2x576xf32, #tpu.memory_space<vmem>>, vector<2x512xf32>,
    %c0_41 = arith.constant 0 : index
    %c512 = arith.constant 512 : index
    %51 = vector.load %arg16[%c0_41, %c512] : memref<2x576xf32, #tpu.memory_space<vmem>>, vector<2x64xf32>
    tpu.vector_store %arg16[%c0_41, %c512], %49 {strides = array<i32>} : memref<2x576xf32, #tpu.memory_space<vmem>>, vector<2x64xf32>,
    return
  }
  func.func @transform_0(%arg0: i32) -> (i32, i32) {
    %c0_i32 = arith.constant 0 : i32
    %c0_i32_0 = arith.constant 0 : i32
    %c0_i32_1 = arith.constant 0 : i32
    return %c0_i32, %c0_i32_0 : i32, i32
  }
  func.func @transform_1(%arg0: i32) -> (i32, i32) {
    %c0_i32 = arith.constant 0 : i32
    %c0_i32_0 = arith.constant 0 : i32
    %c0_i32_1 = arith.constant 0 : i32
    return %c0_i32, %c0_i32_0 : i32, i32
  }
  func.func @transform_2(%arg0: i32) -> (i32, i32) {
    %c0_i32 = arith.constant 0 : i32
    %c0_i32_0 = arith.constant 0 : i32
    %c0_i32_1 = arith.constant 0 : i32
    return %c0_i32, %c0_i32_0 : i32, i32
  }
  func.func @transform_3(%arg0: i32) -> (i32, i32) {
    %c0_i32 = arith.constant 0 : i32
    %c0_i32_0 = arith.constant 0 : i32
    %c0_i32_1 = arith.constant 0 : i32
    return %c0_i32, %c0_i32_0 : i32, i32
  }
  func.func @transform_4(%arg0: i32) -> (i32, i32) {
    %c0_i32 = arith.constant 0 : i32
    %c0_i32_0 = arith.constant 0 : i32
    %c0_i32_1 = arith.constant 0 : i32
    return %c0_i32, %c0_i32_0 : i32, i32
  }
  func.func @transform_5(%arg0: i32) -> (i32, i32) {
    %c0_i32 = arith.constant 0 : i32
    %c0_i32_0 = arith.constant 0 : i32
    %c0_i32_1 = arith.constant 0 : i32
    return %c0_i32, %c0_i32_0 : i32, i32
  }
  func.func @transform_6(%arg0: i32) -> (i32, i32) {
    %c0_i32 = arith.constant 0 : i32
    %c0_i32_0 = arith.constant 0 : i32
    %c0_i32_1 = arith.constant 0 : i32
    return %c0_i32, %c0_i32_0 : i32, i32
  }
  func.func @transform_7(%arg0: i32) -> (i32, i32) {
    %c0_i32 = arith.constant 0 : i32
    %c0_i32_0 = arith.constant 0 : i32
    %c0_i32_1 = arith.constant 0 : i32
    return %c0_i32, %c0_i32_0 : i32, i32
  }
  func.func @transform_8(%arg0: i32) -> (i32, i32) {
    %c0_i32 = arith.constant 0 : i32
    %c0_i32_0 = arith.constant 0 : i32
    %c0_i32_1 = arith.constant 0 : i32
    return %c0_i32, %c0_i32_0 : i32, i32
  }
  func.func @transform_9(%arg0: i32) -> (i32, i32) {
    %c0_i32 = arith.constant 0 : i32
    %c0_i32_0 = arith.constant 0 : i32
    %c0_i32_1 = arith.constant 0 : i32
    return %c0_i32, %c0_i32_0 : i32, i32
  }
  func.func @transform_10(%arg0: i32) -> (i32, i32) {
    %c0_i32 = arith.constant 0 : i32
    %c0_i32_0 = arith.constant 0 : i32
    %c0_i32_1 = arith.constant 0 : i32
    return %c0_i32, %c0_i32_0 : i32, i32
  }
  func.func @transform_11(%arg0: i32) -> (i32, i32) {
    %c0_i32 = arith.constant 0 : i32
    %c0_i32_0 = arith.constant 0 : i32
    %c0_i32_1 = arith.constant 0 : i32
    return %c0_i32, %c0_i32_0 : i32, i32
  }
  func.func @transform_12(%arg0: i32) -> (i32, i32) {
    %c0_i32 = arith.constant 0 : i32
    %c0_i32_0 = arith.constant 0 : i32
    %c0_i32_1 = arith.constant 0 : i32
    return %c0_i32, %c0_i32_0 : i32, i32
  }
  func.func @transform_13(%arg0: i32) -> (i32, i32) {
    %c0_i32 = arith.constant 0 : i32
    %c0_i32_0 = arith.constant 0 : i32
    %c0_i32_1 = arith.constant 0 : i32
    return %c0_i32, %c0_i32_0 : i32, i32
  }
  func.func @transform_14(%arg0: i32) -> (i32, i32) {
    %c0_i32 = arith.constant 0 : i32
    %c0_i32_0 = arith.constant 0 : i32
    %c0_i32_1 = arith.constant 0 : i32
    return %c0_i32, %c0_i32_0 : i32, i32
  }
  func.func @transform_15(%arg0: i32) -> (i32, i32) {
    %c0_i32 = arith.constant 0 : i32
    %c0_i32_0 = arith.constant 0 : i32
    %c0_i32_1 = arith.constant 0 : i32
    return %c0_i32, %c0_i32_0 : i32, i32
  }
}

</mosaic_0001>

<llo_original>
// kernel: common_forward.1
$region0: #{common_forward.1}
  #allocation0 [shape = 'u32[]', space=smem, size = 0x4, offset = 0x4, fixed_abs, tag = 'smem constant byte address 0x4 - core index']
  #allocation1 [shape = 'u32[144,128]{1,0:T(1,128)}', space=vmem, size = 0x12000, scoped, tag = 'internal scratch']
  %s0 = inlined_call_operand.vmem [shape: bf16[98,256], index: 0, kind: input, shape index: {}]
  %s1 = inlined_call_operand.vmem [shape: bf16[256,16], index: 1, kind: input, shape index: {}]
  %s2 = inlined_call_operand.vmem [shape: f32[1,16], index: 2, kind: input, shape index: {}]
  %s3 = inlined_call_operand.vmem [shape: bf16[16,784], index: 3, kind: input, shape index: {}]
  %s4 = inlined_call_operand.vmem [shape: f32[98,784], index: 4, kind: input, shape index: {}]
  %s5 = inlined_call_operand.vmem [shape: bf16[2,98], index: 5, kind: input, shape index: {}]
  %s6 = inlined_call_operand.vmem [shape: bf16[784,128], index: 6, kind: input, shape index: {}]
  %s7 = inlined_call_operand.vmem [shape: f32[1,128], index: 7, kind: input, shape index: {}]
  %s8 = inlined_call_operand.vmem [shape: bf16[128,256], index: 8, kind: input, shape index: {}]
  %s9 = inlined_call_operand.vmem [shape: f32[1,256], index: 9, kind: input, shape index: {}]
  %s10 = inlined_call_operand.vmem [shape: bf16[256,512], index: 10, kind: input, shape index: {}]
  %s11 = inlined_call_operand.vmem [shape: f32[1,512], index: 11, kind: input, shape index: {}]
  %s12 = inlined_call_operand.vmem [shape: f32[2,4], index: 12, kind: input, shape index: {}]
  %s13 = inlined_call_operand.vmem [shape: f32[4,64], index: 13, kind: input, shape index: {}]
  %s14 = inlined_call_operand.vmem [shape: f32[1,64], index: 14, kind: input, shape index: {}]
  %s15 = inlined_call_operand.hbm [shape: f32[2,576], index: 15, kind: output, shape index: {}]
  %s16 = sld [smem:[#allocation0]]
  $region70: #{common_forward.1} parent=0
    _
  %s18 = ssub.s32 1, %s16
  %s19 = scalar_select 0, %s18, %s16
  $region1: #{common_forward.1} parent=0
    #allocation2 [shape = 'u8[5120]{0}', space=vmem, size = 0x1400, scoped, tag = 'output window, operand 0, single buffered']
    #allocation3 [shape = 's32[1]{0}', space=sflag, size = 0x4, scoped, tag = 'scoped memory for common_forward.1']
    %20 = vsyncpa [#allocation3], 0
    // Predicated region
    $region2: #{common_forward.1} parent=1 // pred_check
      _
    $region3: #{common_forward.1} parent=1 // pred_check_branch
      %22 = sbr.rel (0) target = $region5
    $region4: #{common_forward.1} parent=1 // pred_region
      _
    $region5: #{common_forward.1} parent=1 // pred_fallthru
      _
    // Predicated region
    $region6: #{common_forward.1} parent=1 // pred_check
      _
    $region7: #{common_forward.1} parent=1 // pred_check_branch
      %24 = sbr.rel (0) target = $region9
    $region8: #{common_forward.1} parent=1 // pred_region
      _
    $region9: #{common_forward.1} parent=1 // pred_fallthru
      _
    // Predicated region
    $region10: #{common_forward.1} parent=1 // pred_check
      _
    $region11: #{common_forward.1} parent=1 // pred_check_branch
      %26 = sbr.rel (0) target = $region13
    $region12: #{common_forward.1} parent=1 // pred_region
      _
    $region13: #{common_forward.1} parent=1 // pred_fallthru
      _
    // Predicated region
    $region14: #{common_forward.1} parent=1 // pred_check
      _
    $region15: #{common_forward.1} parent=1 // pred_check_branch
      %28 = sbr.rel (0) target = $region17
    $region16: #{common_forward.1} parent=1 // pred_region
      _
    $region17: #{common_forward.1} parent=1 // pred_fallthru
      _
    // Predicated region
    $region18: #{common_forward.1} parent=1 // pred_check
      _
    $region19: #{common_forward.1} parent=1 // pred_check_branch
      %30 = sbr.rel (0) target = $region21
    $region20: #{common_forward.1} parent=1 // pred_region
      _
    $region21: #{common_forward.1} parent=1 // pred_fallthru
      _
    // Predicated region
    $region22: #{common_forward.1} parent=1 // pred_check
      _
    $region23: #{common_forward.1} parent=1 // pred_check_branch
      %32 = sbr.rel (0) target = $region25
    $region24: #{common_forward.1} parent=1 // pred_region
      _
    $region25: #{common_forward.1} parent=1 // pred_fallthru
      _
    // Predicated region
    $region26: #{common_forward.1} parent=1 // pred_check
      _
    $region27: #{common_forward.1} parent=1 // pred_check_branch
      %34 = sbr.rel (0) target = $region29
    $region28: #{common_forward.1} parent=1 // pred_region
      _
    $region29: #{common_forward.1} parent=1 // pred_fallthru
      _
    // Predicated region
    $region30: #{common_forward.1} parent=1 // pred_check
      _
    $region31: #{common_forward.1} parent=1 // pred_check_branch
      %36 = sbr.rel (0) target = $region33
    $region32: #{common_forward.1} parent=1 // pred_region
      _
    $region33: #{common_forward.1} parent=1 // pred_fallthru
      _
    // Predicated region
    $region34: #{common_forward.1} parent=1 // pred_check
      _
    $region35: #{common_forward.1} parent=1 // pred_check_branch
      %38 = sbr.rel (0) target = $region37
    $region36: #{common_forward.1} parent=1 // pred_region
      _
    $region37: #{common_forward.1} parent=1 // pred_fallthru
      _
    // Predicated region
    $region38: #{common_forward.1} parent=1 // pred_check
      _
    $region39: #{common_forward.1} parent=1 // pred_check_branch
      %40 = sbr.rel (0) target = $region41
    $region40: #{common_forward.1} parent=1 // pred_region
      _
    $region41: #{common_forward.1} parent=1 // pred_fallthru
      _
    // Predicated region
    $region42: #{common_forward.1} parent=1 // pred_check
      _
    $region43: #{common_forward.1} parent=1 // pred_check_branch
      %42 = sbr.rel (0) target = $region45
    $region44: #{common_forward.1} parent=1 // pred_region
      _
    $region45: #{common_forward.1} parent=1 // pred_fallthru
      _
    // Predicated region
    $region46: #{common_forward.1} parent=1 // pred_check
      _
    $region47: #{common_forward.1} parent=1 // pred_check_branch
      %44 = sbr.rel (0) target = $region49
    $region48: #{common_forward.1} parent=1 // pred_region
      _
    $region49: #{common_forward.1} parent=1 // pred_fallthru
      _
    // Predicated region
    $region50: #{common_forward.1} parent=1 // pred_check
      _
    $region51: #{common_forward.1} parent=1 // pred_check_branch
      %46 = sbr.rel (0) target = $region53
    $region52: #{common_forward.1} parent=1 // pred_region
      _
    $region53: #{common_forward.1} parent=1 // pred_fallthru
      _
    // Predicated region
    $region54: #{common_forward.1} parent=1 // pred_check
      _
    $region55: #{common_forward.1} parent=1 // pred_check_branch
      %48 = sbr.rel (0) target = $region57
    $region56: #{common_forward.1} parent=1 // pred_region
      _
    $region57: #{common_forward.1} parent=1 // pred_fallthru
      _
    // Predicated region
    $region58: #{common_forward.1} parent=1 // pred_check
      _
    $region59: #{common_forward.1} parent=1 // pred_check_branch
      %50 = sbr.rel (0) target = $region61
    $region60: #{common_forward.1} parent=1 // pred_region
      _
    $region61: #{common_forward.1} parent=1 // pred_fallthru
      _
    %v52 = vld [vmem:[%s0] sm:$0xff]
    %v53 = vld [vmem:[%s0 + $0x8] sm:$0xff]
    %v54 = vld [vmem:[%s0 + $0x10] sm:$0xff]
    %v55 = vld [vmem:[%s0 + $0x18] sm:$0xff]
    %v56 = vld [vmem:[%s0 + $0x20] sm:$0xff]
    %v57 = vld [vmem:[%s0 + $0x28] sm:$0xff]
    %v58 = vld [vmem:[%s0 + $0x30] sm:$0xff]
    %v59 = vld [vmem:[%s0 + $0x38] sm:$0xff]
    %v60 = vld [vmem:[%s0 + $0x40] sm:$0xff]
    %v61 = vld [vmem:[%s0 + $0x48] sm:$0xff]
    %v62 = vld [vmem:[%s0 + $0x50] sm:$0xff]
    %v63 = vld [vmem:[%s0 + $0x58] sm:$0xff]
    %v64 = vld [vmem:[%s0 + $0x60] sm:$0x11]
    %v65 = vld [vmem:[%s1] sm:$0xf]
    %v66 = vld [vmem:[%s1 + $0x4] sm:$0xf]
    %v67 = vld [vmem:[%s1 + $0x8] sm:$0xf]
    %v68 = vld [vmem:[%s1 + $0xc] sm:$0xf]
    %v69 = vld [vmem:[%s1 + $0x10] sm:$0xf]
    %v70 = vld [vmem:[%s1 + $0x14] sm:$0xf]
    %v71 = vld [vmem:[%s1 + $0x18] sm:$0xf]
    %v72 = vld [vmem:[%s1 + $0x1c] sm:$0xf]
    %v73 = vld [vmem:[%s1 + $0x20] sm:$0xf]
    %v74 = vld [vmem:[%s1 + $0x24] sm:$0xf]
    %v75 = vld [vmem:[%s1 + $0x28] sm:$0xf]
    %v76 = vld [vmem:[%s1 + $0x2c] sm:$0xf]
    %v77 = vld [vmem:[%s1 + $0x30] sm:$0xf]
    %v78 = vld [vmem:[%s1 + $0x34] sm:$0xf]
    %v79 = vld [vmem:[%s1 + $0x38] sm:$0xf]
    %v80 = vld [vmem:[%s1 + $0x3c] sm:$0xf]
    %v81 = vld [vmem:[%s1 + $0x40] sm:$0xf]
    %v82 = vld [vmem:[%s1 + $0x44] sm:$0xf]
    %v83 = vld [vmem:[%s1 + $0x48] sm:$0xf]
    %v84 = vld [vmem:[%s1 + $0x4c] sm:$0xf]
    %v85 = vld [vmem:[%s1 + $0x50] sm:$0xf]
    %v86 = vld [vmem:[%s1 + $0x54] sm:$0xf]
    %v87 = vld [vmem:[%s1 + $0x58] sm:$0xf]
    %v88 = vld [vmem:[%s1 + $0x5c] sm:$0xf]
    %v89 = vld [vmem:[%s1 + $0x60] sm:$0xf]
    %v90 = vld [vmem:[%s1 + $0x64] sm:$0xf]
    %v91 = vld [vmem:[%s1 + $0x68] sm:$0xf]
    %v92 = vld [vmem:[%s1 + $0x6c] sm:$0xf]
    %v93 = vld [vmem:[%s1 + $0x70] sm:$0xf]
    %v94 = vld [vmem:[%s1 + $0x74] sm:$0xf]
    %v95 = vld [vmem:[%s1 + $0x78] sm:$0xf]
    %v96 = vld [vmem:[%s1 + $0x7c] sm:$0xf]
    %v97 = vld [vmem:[%s2] sm:$0x1]
    %v99 = vlaneseq
    %v100 = vshrl.u32 %v99, 7
    %v101 = vsub.s32 0, %v100
    %v102 = vrot.slane %v97, %v101
    %v117 = vunpack.c.l.b16 %v52
    %v118 = vunpack.c.h.b16 %v52
    %v119 = vunpack.c.l.b16 %v53
    %v120 = vunpack.c.h.b16 %v53
    %v121 = vunpack.c.l.b16 %v54
    %v122 = vunpack.c.h.b16 %v54
    %v123 = vunpack.c.l.b16 %v55
    %v124 = vunpack.c.h.b16 %v55
    %v125 = vunpack.c.l.b16 %v56
    %v126 = vunpack.c.h.b16 %v56
    %v127 = vunpack.c.l.b16 %v57
    %v128 = vunpack.c.h.b16 %v57
    %v129 = vunpack.c.l.b16 %v58
    %v130 = vunpack.c.h.b16 %v58
    %v131 = vunpack.c.l.b16 %v59
    %v132 = vunpack.c.h.b16 %v59
    %v133 = vunpack.c.l.b16 %v60
    %v134 = vunpack.c.h.b16 %v60
    %v135 = vunpack.c.l.b16 %v61
    %v136 = vunpack.c.h.b16 %v61
    %v137 = vunpack.c.l.b16 %v62
    %v138 = vunpack.c.h.b16 %v62
    %v139 = vunpack.c.l.b16 %v63
    %v140 = vunpack.c.h.b16 %v63
    %v141 = vunpack.c.l.b16 %v64
    %v142 = vunpack.c.h.b16 %v64
    %v143 = vpack.c.b16 %v119, %v117
    %v144 = vpack.c.b16 %v120, %v118
    %v145 = vpack.c.b16 %v123, %v121
    %v146 = vpack.c.b16 %v124, %v122
    %v147 = vpack.c.b16 %v127, %v125
    %v148 = vpack.c.b16 %v128, %v126
    %v149 = vpack.c.b16 %v131, %v129
    %v150 = vpack.c.b16 %v132, %v130
    %v151 = vpack.c.b16 %v135, %v133
    %v152 = vpack.c.b16 %v136, %v134
    %v153 = vpack.c.b16 %v139, %v137
    %v154 = vpack.c.b16 %v140, %v138
    %v155 = vpack.c.b16 %v141, %v141
    %v156 = vpack.c.b16 %v142, %v142
    %v203 = vunpack.c.l.b16 %v65
    %v204 = vunpack.c.l.b16 %v66
    %v205 = vunpack.c.l.b16 %v67
    %v206 = vunpack.c.l.b16 %v68
    %v207 = vunpack.c.l.b16 %v69
    %v208 = vunpack.c.l.b16 %v70
    %v209 = vunpack.c.l.b16 %v71
    %v210 = vunpack.c.l.b16 %v72
    %v211 = vunpack.c.l.b16 %v73
    %v212 = vunpack.c.l.b16 %v74
    %v213 = vunpack.c.l.b16 %v75
    %v214 = vunpack.c.l.b16 %v76
    %v215 = vunpack.c.l.b16 %v77
    %v216 = vunpack.c.l.b16 %v78
    %v217 = vunpack.c.l.b16 %v79
    %v218 = vunpack.c.l.b16 %v80
    %v219 = vunpack.c.l.b16 %v81
    %v220 = vunpack.c.l.b16 %v82
    %v221 = vunpack.c.l.b16 %v83
    %v222 = vunpack.c.l.b16 %v84
    %v223 = vunpack.c.l.b16 %v85
    %v224 = vunpack.c.l.b16 %v86
    %v225 = vunpack.c.l.b16 %v87
    %v226 = vunpack.c.l.b16 %v88
    %v227 = vunpack.c.l.b16 %v89
    %v228 = vunpack.c.l.b16 %v90
    %v229 = vunpack.c.l.b16 %v91
    %v230 = vunpack.c.l.b16 %v92
    %v231 = vunpack.c.l.b16 %v93
    %v232 = vunpack.c.l.b16 %v94
    %v233 = vunpack.c.l.b16 %v95
    %v234 = vunpack.c.l.b16 %v96
    %v235 = vpack.c.b16 %v204, %v203
    %v236 = vpack.c.b16 %v206, %v205
    %v237 = vpack.c.b16 %v208, %v207
    %v238 = vpack.c.b16 %v210, %v209
    %v239 = vpack.c.b16 %v212, %v211
    %v240 = vpack.c.b16 %v214, %v213
    %v241 = vpack.c.b16 %v216, %v215
    %v242 = vpack.c.b16 %v218, %v217
    %v243 = vpack.c.b16 %v220, %v219
    %v244 = vpack.c.b16 %v222, %v221
    %v245 = vpack.c.b16 %v224, %v223
    %v246 = vpack.c.b16 %v226, %v225
    %v247 = vpack.c.b16 %v228, %v227
    %v248 = vpack.c.b16 %v230, %v229
    %v249 = vpack.c.b16 %v232, %v231
    %v250 = vpack.c.b16 %v234, %v233
    %267 = vmatprep.subr.bf16.mxu0 0
    %268 = vmatpush1.bf16.msra.mxu0 %v242
    %269 = vmatprep.subr.bf16.mxu0 0
    %270 = vmatpush1.bf16.msra.mxu0 %v241
    %271 = vmatprep.subr.bf16.mxu0 0
    %272 = vmatpush1.bf16.msra.mxu0 %v240
    %273 = vmatprep.subr.bf16.mxu0 0
    %274 = vmatpush1.bf16.msra.mxu0 %v239
    %275 = vmatprep.subr.bf16.mxu0 0
    %276 = vmatpush1.bf16.msra.mxu0 %v238
    %277 = vmatprep.subr.bf16.mxu0 0
    %278 = vmatpush1.bf16.msra.mxu0 %v237
    %279 = vmatprep.subr.bf16.mxu0 0
    %280 = vmatpush1.bf16.msra.mxu0 %v236
    %281 = vmatprep.subr.bf16.mxu0 0
    %282 = vmatpush1.bf16.msra.mxu0 %v235
    %283 = vmatprep.subr.bf16.mxu0 0
    %284 = vmatpush2.bf16.msra.mxu0 %v250
    %285 = vmatprep.subr.bf16.mxu0 0
    %286 = vmatpush2.bf16.msra.mxu0 %v249
    %287 = vmatprep.subr.bf16.mxu0 0
    %288 = vmatpush2.bf16.msra.mxu0 %v248
    %289 = vmatprep.subr.bf16.mxu0 0
    %290 = vmatpush2.bf16.msra.mxu0 %v247
    %291 = vmatprep.subr.bf16.mxu0 0
    %292 = vmatpush2.bf16.msra.mxu0 %v246
    %293 = vmatprep.subr.bf16.mxu0 0
    %294 = vmatpush2.bf16.msra.mxu0 %v245
    %295 = vmatprep.subr.bf16.mxu0 0
    %296 = vmatpush2.bf16.msra.mxu0 %v244
    %297 = vmatprep.subr.bf16.mxu0 0
    %298 = vmatpush2.bf16.msra.mxu0 %v243
    %299 = vmatprep.mubr.bf16.mxu0 %v144
    %300 = vmatmul.mubr.bf16.gmra.mxu0 %v143
    %v301 = vpop.f32.mrf.mxu0
    %v302 = vadd.f32 %v102, %v301
    %v303 = vpop.f32.mrf.mxu0
    %v304 = vpop.f32.mrf.mxu0
    %v305 = vadd.f32 %v102, %v304
    %v306 = vpop.f32.mrf.mxu0
    %307 = vmatprep.mubr.bf16.mxu0 %v146
    %308 = vmatmul.mubr.bf16.gmra.mxu0 %v145
    %v309 = vpop.f32.mrf.mxu0
    %v310 = vadd.f32 %v102, %v309
    %v311 = vpop.f32.mrf.mxu0
    %v312 = vpop.f32.mrf.mxu0
    %v313 = vadd.f32 %v102, %v312
    %v314 = vpop.f32.mrf.mxu0
    %315 = vmatprep.mubr.bf16.mxu0 %v148
    %316 = vmatmul.mubr.bf16.gmra.mxu0 %v147
    %v317 = vpop.f32.mrf.mxu0
    %v318 = vadd.f32 %v102, %v317
    %v319 = vpop.f32.mrf.mxu0
    %v320 = vpop.f32.mrf.mxu0
    %v321 = vadd.f32 %v102, %v320
    %v322 = vpop.f32.mrf.mxu0
    %323 = vmatprep.mubr.bf16.mxu0 %v150
    %324 = vmatmul.mubr.bf16.gmra.mxu0 %v149
    %v325 = vpop.f32.mrf.mxu0
    %v326 = vadd.f32 %v102, %v325
    %v327 = vpop.f32.mrf.mxu0
    %v328 = vpop.f32.mrf.mxu0
    %v329 = vadd.f32 %v102, %v328
    %v330 = vpop.f32.mrf.mxu0
    %331 = vmatprep.mubr.bf16.mxu0 %v152
    %332 = vmatmul.mubr.bf16.gmra.mxu0 %v151
    %v333 = vpop.f32.mrf.mxu0
    %v334 = vadd.f32 %v102, %v333
    %v335 = vpop.f32.mrf.mxu0
    %v336 = vpop.f32.mrf.mxu0
    %v337 = vadd.f32 %v102, %v336
    %v338 = vpop.f32.mrf.mxu0
    %339 = vmatprep.mubr.bf16.mxu0 %v154
    %340 = vmatmul.mubr.bf16.gmra.mxu0 %v153
    %v341 = vpop.f32.mrf.mxu0
    %v342 = vadd.f32 %v102, %v341
    %v343 = vpop.f32.mrf.mxu0
    %v344 = vpop.f32.mrf.mxu0
    %v345 = vadd.f32 %v102, %v344
    %v346 = vpop.f32.mrf.mxu0
    %347 = vmatprep.mubr.bf16.mxu0 %v156
    %348 = vmatmul.mubr.bf16.gmra.mxu0 %v155
    %v349 = vpop.f32.mrf.mxu0
    %v350 = vadd.f32 %v102, %v349
    %v351 = vpop.f32.mrf.mxu0
    %v352 = vpop.f32.mrf.mxu0
    %v353 = vpop.f32.mrf.mxu0
    %354 = vdwg.mxu0
    %v355 = vmul.f32 %v302, 0.01
    %v356 = vmul.f32 %v305, 0.01
    %v357 = vmul.f32 %v310, 0.01
    %v358 = vmul.f32 %v313, 0.01
    %v359 = vmul.f32 %v318, 0.01
    %v360 = vmul.f32 %v321, 0.01
    %v361 = vmul.f32 %v326, 0.01
    %v362 = vmul.f32 %v329, 0.01
    %v363 = vmul.f32 %v334, 0.01
    %v364 = vmul.f32 %v337, 0.01
    %v365 = vmul.f32 %v342, 0.01
    %v366 = vmul.f32 %v345, 0.01
    %v367 = vmul.f32 %v350, 0.01
    %v368 = vmax.f32 %v302, %v355
    %v369 = vmax.f32 %v305, %v356
    %v370 = vmax.f32 %v310, %v357
    %v371 = vmax.f32 %v313, %v358
    %v372 = vmax.f32 %v318, %v359
    %v373 = vmax.f32 %v321, %v360
    %v374 = vmax.f32 %v326, %v361
    %v375 = vmax.f32 %v329, %v362
    %v376 = vmax.f32 %v334, %v363
    %v377 = vmax.f32 %v337, %v364
    %v378 = vmax.f32 %v342, %v365
    %v379 = vmax.f32 %v345, %v366
    %v380 = vmax.f32 %v350, %v367
    %v381 = vpack.c.bf16 %v369, %v368
    %v382 = vpack.c.bf16 %v371, %v370
    %v383 = vpack.c.bf16 %v373, %v372
    %v384 = vpack.c.bf16 %v375, %v374
    %v385 = vpack.c.bf16 %v377, %v376
    %v386 = vpack.c.bf16 %v379, %v378
    %v387 = vpack.c.bf16 %v380, %v380
    %v388 = vld [vmem:[%s3] sm:$0xff]
    %v389 = vld [vmem:[%s3 + $0x8] sm:$0xff]
    %v390 = vld [vmem:[%s3 + $0x10] sm:$0xff]
    %v391 = vld [vmem:[%s3 + $0x18] sm:$0xf]
    %v392 = vld [vmem:[%s3 + $0x1c] sm:$0xff]
    %v393 = vld [vmem:[%s3 + $0x24] sm:$0xff]
    %v394 = vld [vmem:[%s3 + $0x2c] sm:$0xff]
    %v395 = vld [vmem:[%s3 + $0x34] sm:$0xf]
    %v404 = vunpack.c.l.b16 %v388
    %v405 = vunpack.c.h.b16 %v388
    %v406 = vunpack.c.l.b16 %v389
    %v407 = vunpack.c.h.b16 %v389
    %v408 = vunpack.c.l.b16 %v390
    %v409 = vunpack.c.h.b16 %v390
    %v410 = vunpack.c.l.b16 %v391
    %v411 = vunpack.c.l.b16 %v392
    %v412 = vunpack.c.h.b16 %v392
    %v413 = vunpack.c.l.b16 %v393
    %v414 = vunpack.c.h.b16 %v393
    %v415 = vunpack.c.l.b16 %v394
    %v416 = vunpack.c.h.b16 %v394
    %v417 = vunpack.c.l.b16 %v395
    %v418 = vpack.c.b16 %v411, %v404
    %v419 = vpack.c.b16 %v412, %v405
    %v420 = vpack.c.b16 %v413, %v406
    %v421 = vpack.c.b16 %v414, %v407
    %v422 = vpack.c.b16 %v415, %v408
    %v423 = vpack.c.b16 %v416, %v409
    %v424 = vpack.c.b16 %v417, %v410
    %vm432 = vcmask 130048
    %v434 = vsel %vm432, %v381, 0
    %v437 = vsel %vm432, %v382, 0
    %v440 = vsel %vm432, %v383, 0
    %v443 = vsel %vm432, %v384, 0
    %v446 = vsel %vm432, %v385, 0
    %v449 = vsel %vm432, %v386, 0
    %v452 = vsel %vm432, %v387, 0
    %454 = vmatprep.subr.bf16.mxu0 0
    %455 = vmatpush1.bf16.msra.mxu0 0
    %456 = vmatprep.subr.bf16.mxu0 0
    %457 = vmatpush1.bf16.msra.mxu0 0
    %458 = vmatprep.subr.bf16.mxu0 0
    %459 = vmatpush1.bf16.msra.mxu0 0
    %460 = vmatprep.subr.bf16.mxu0 0
    %461 = vmatpush1.bf16.msra.mxu0 0
    %462 = vmatprep.subr.bf16.mxu0 0
    %463 = vmatpush1.bf16.msra.mxu0 0
    %464 = vmatprep.subr.bf16.mxu0 0
    %465 = vmatpush1.bf16.msra.mxu0 0
    %466 = vmatprep.subr.bf16.mxu0 0
    %467 = vmatpush1.bf16.msra.mxu0 0
    %468 = vmatprep.subr.bf16.mxu0 %v419
    %469 = vmatpush1.bf16.msra.mxu0 %v418
    %470 = vmatprep.subr.bf16.mxu0 0
    %471 = vmatpush2.bf16.msra.mxu0 0
    %472 = vmatprep.subr.bf16.mxu0 0
    %473 = vmatpush2.bf16.msra.mxu0 0
    %474 = vmatprep.subr.bf16.mxu0 0
    %475 = vmatpush2.bf16.msra.mxu0 0
    %476 = vmatprep.subr.bf16.mxu0 0
    %477 = vmatpush2.bf16.msra.mxu0 0
    %478 = vmatprep.subr.bf16.mxu0 0
    %479 = vmatpush2.bf16.msra.mxu0 0
    %480 = vmatprep.subr.bf16.mxu0 0
    %481 = vmatpush2.bf16.msra.mxu0 0
    %482 = vmatprep.subr.bf16.mxu0 0
    %483 = vmatpush2.bf16.msra.mxu0 0
    %484 = vmatprep.subr.bf16.mxu0 0
    %485 = vmatpush2.bf16.msra.mxu0 0
    %486 = vmatprep.mubr.bf16.mxu0 0
    %487 = vmatmul.mubr.bf16.gmra.mxu0 %v434
    %v488 = vpop.f32.mrf.mxu0
    %v489 = vadd.f32 0.0, %v488
    %v490 = vpop.f32.mrf.mxu0
    %v491 = vadd.f32 0.0, %v490
    %v492 = vpop.f32.mrf.mxu0
    %v493 = vadd.f32 0.0, %v492
    %v494 = vpop.f32.mrf.mxu0
    %v495 = vadd.f32 0.0, %v494
    %496 = vmatprep.mubr.bf16.mxu0 0
    %497 = vmatmul.mubr.bf16.gmra.mxu0 %v437
    %v498 = vpop.f32.mrf.mxu0
    %v499 = vadd.f32 0.0, %v498
    %v500 = vpop.f32.mrf.mxu0
    %v501 = vadd.f32 0.0, %v500
    %v502 = vpop.f32.mrf.mxu0
    %v503 = vadd.f32 0.0, %v502
    %v504 = vpop.f32.mrf.mxu0
    %v505 = vadd.f32 0.0, %v504
    %506 = vmatprep.mubr.bf16.mxu0 0
    %507 = vmatmul.mubr.bf16.gmra.mxu0 %v440
    %v508 = vpop.f32.mrf.mxu0
    %v509 = vadd.f32 0.0, %v508
    %v510 = vpop.f32.mrf.mxu0
    %v511 = vadd.f32 0.0, %v510
    %v512 = vpop.f32.mrf.mxu0
    %v513 = vadd.f32 0.0, %v512
    %v514 = vpop.f32.mrf.mxu0
    %v515 = vadd.f32 0.0, %v514
    %516 = vmatprep.mubr.bf16.mxu0 0
    %517 = vmatmul.mubr.bf16.gmra.mxu0 %v443
    %v518 = vpop.f32.mrf.mxu0
    %v519 = vadd.f32 0.0, %v518
    %v520 = vpop.f32.mrf.mxu0
    %v521 = vadd.f32 0.0, %v520
    %v522 = vpop.f32.mrf.mxu0
    %v523 = vadd.f32 0.0, %v522
    %v524 = vpop.f32.mrf.mxu0
    %v525 = vadd.f32 0.0, %v524
    %526 = vmatprep.mubr.bf16.mxu0 0
    %527 = vmatmul.mubr.bf16.gmra.mxu0 %v446
    %v528 = vpop.f32.mrf.mxu0
    %v529 = vadd.f32 0.0, %v528
    %v530 = vpop.f32.mrf.mxu0
    %v531 = vadd.f32 0.0, %v530
    %v532 = vpop.f32.mrf.mxu0
    %v533 = vadd.f32 0.0, %v532
    %v534 = vpop.f32.mrf.mxu0
    %v535 = vadd.f32 0.0, %v534
    %536 = vmatprep.mubr.bf16.mxu0 0
    %537 = vmatmul.mubr.bf16.gmra.mxu0 %v449
    %v538 = vpop.f32.mrf.mxu0
    %v539 = vadd.f32 0.0, %v538
    %v540 = vpop.f32.mrf.mxu0
    %v541 = vadd.f32 0.0, %v540
    %v542 = vpop.f32.mrf.mxu0
    %v543 = vadd.f32 0.0, %v542
    %v544 = vpop.f32.mrf.mxu0
    %v545 = vadd.f32 0.0, %v544
    %546 = vmatprep.mubr.bf16.mxu0 0
    %547 = vmatmul.mubr.bf16.gmra.mxu0 %v452
    %v548 = vpop.f32.mrf.mxu0
    %v549 = vadd.f32 0.0, %v548
    %v550 = vpop.f32.mrf.mxu0
    %v551 = vadd.f32 0.0, %v550
    %v552 = vpop.f32.mrf.mxu0
    %v553 = vpop.f32.mrf.mxu0
    %554 = vdwg.mxu0
    %555 = vmatprep.subr.bf16.mxu0 0
    %556 = vmatpush1.bf16.msra.mxu0 0
    %557 = vmatprep.subr.bf16.mxu0 0
    %558 = vmatpush1.bf16.msra.mxu0 0
    %559 = vmatprep.subr.bf16.mxu0 0
    %560 = vmatpush1.bf16.msra.mxu0 0
    %561 = vmatprep.subr.bf16.mxu0 0
    %562 = vmatpush1.bf16.msra.mxu0 0
    %563 = vmatprep.subr.bf16.mxu0 0
    %564 = vmatpush1.bf16.msra.mxu0 0
    %565 = vmatprep.subr.bf16.mxu0 0
    %566 = vmatpush1.bf16.msra.mxu0 0
    %567 = vmatprep.subr.bf16.mxu0 0
    %568 = vmatpush1.bf16.msra.mxu0 0
    %569 = vmatprep.subr.bf16.mxu0 %v421
    %570 = vmatpush1.bf16.msra.mxu0 %v420
    %571 = vmatprep.subr.bf16.mxu0 0
    %572 = vmatpush2.bf16.msra.mxu0 0
    %573 = vmatprep.subr.bf16.mxu0 0
    %574 = vmatpush2.bf16.msra.mxu0 0
    %575 = vmatprep.subr.bf16.mxu0 0
    %576 = vmatpush2.bf16.msra.mxu0 0
    %577 = vmatprep.subr.bf16.mxu0 0
    %578 = vmatpush2.bf16.msra.mxu0 0
    %579 = vmatprep.subr.bf16.mxu0 0
    %580 = vmatpush2.bf16.msra.mxu0 0
    %581 = vmatprep.subr.bf16.mxu0 0
    %582 = vmatpush2.bf16.msra.mxu0 0
    %583 = vmatprep.subr.bf16.mxu0 0
    %584 = vmatpush2.bf16.msra.mxu0 0
    %585 = vmatprep.subr.bf16.mxu0 0
    %586 = vmatpush2.bf16.msra.mxu0 0
    %587 = vmatprep.mubr.bf16.mxu0 0
    %588 = vmatmul.mubr.bf16.gmra.mxu0 %v434
    %v589 = vpop.f32.mrf.mxu0
    %v590 = vadd.f32 0.0, %v589
    %v591 = vpop.f32.mrf.mxu0
    %v592 = vadd.f32 0.0, %v591
    %v593 = vpop.f32.mrf.mxu0
    %v594 = vadd.f32 0.0, %v593
    %v595 = vpop.f32.mrf.mxu0
    %v596 = vadd.f32 0.0, %v595
    %597 = vmatprep.mubr.bf16.mxu0 0
    %598 = vmatmul.mubr.bf16.gmra.mxu0 %v437
    %v599 = vpop.f32.mrf.mxu0
    %v600 = vadd.f32 0.0, %v599
    %v601 = vpop.f32.mrf.mxu0
    %v602 = vadd.f32 0.0, %v601
    %v603 = vpop.f32.mrf.mxu0
    %v604 = vadd.f32 0.0, %v603
    %v605 = vpop.f32.mrf.mxu0
    %v606 = vadd.f32 0.0, %v605
    %607 = vmatprep.mubr.bf16.mxu0 0
    %608 = vmatmul.mubr.bf16.gmra.mxu0 %v440
    %v609 = vpop.f32.mrf.mxu0
    %v610 = vadd.f32 0.0, %v609
    %v611 = vpop.f32.mrf.mxu0
    %v612 = vadd.f32 0.0, %v611
    %v613 = vpop.f32.mrf.mxu0
    %v614 = vadd.f32 0.0, %v613
    %v615 = vpop.f32.mrf.mxu0
    %v616 = vadd.f32 0.0, %v615
    %617 = vmatprep.mubr.bf16.mxu0 0
    %618 = vmatmul.mubr.bf16.gmra.mxu0 %v443
    %v619 = vpop.f32.mrf.mxu0
    %v620 = vadd.f32 0.0, %v619
    %v621 = vpop.f32.mrf.mxu0
    %v622 = vadd.f32 0.0, %v621
    %v623 = vpop.f32.mrf.mxu0
    %v624 = vadd.f32 0.0, %v623
    %v625 = vpop.f32.mrf.mxu0
    %v626 = vadd.f32 0.0, %v625
    %627 = vmatprep.mubr.bf16.mxu0 0
    %628 = vmatmul.mubr.bf16.gmra.mxu0 %v446
    %v629 = vpop.f32.mrf.mxu0
    %v630 = vadd.f32 0.0, %v629
    %v631 = vpop.f32.mrf.mxu0
    %v632 = vadd.f32 0.0, %v631
    %v633 = vpop.f32.mrf.mxu0
    %v634 = vadd.f32 0.0, %v633
    %v635 = vpop.f32.mrf.mxu0
    %v636 = vadd.f32 0.0, %v635
    %637 = vmatprep.mubr.bf16.mxu0 0
    %638 = vmatmul.mubr.bf16.gmra.mxu0 %v449
    %v639 = vpop.f32.mrf.mxu0
    %v640 = vadd.f32 0.0, %v639
    %v641 = vpop.f32.mrf.mxu0
    %v642 = vadd.f32 0.0, %v641
    %v643 = vpop.f32.mrf.mxu0
    %v644 = vadd.f32 0.0, %v643
    %v645 = vpop.f32.mrf.mxu0
    %v646 = vadd.f32 0.0, %v645
    %647 = vmatprep.mubr.bf16.mxu0 0
    %648 = vmatmul.mubr.bf16.gmra.mxu0 %v452
    %v649 = vpop.f32.mrf.mxu0
    %v650 = vadd.f32 0.0, %v649
    %v651 = vpop.f32.mrf.mxu0
    %v652 = vadd.f32 0.0, %v651
    %v653 = vpop.f32.mrf.mxu0
    %v654 = vpop.f32.mrf.mxu0
    %655 = vdwg.mxu0
    %656 = vmatprep.subr.bf16.mxu0 0
    %657 = vmatpush1.bf16.msra.mxu0 0
    %658 = vmatprep.subr.bf16.mxu0 0
    %659 = vmatpush1.bf16.msra.mxu0 0
    %660 = vmatprep.subr.bf16.mxu0 0
    %661 = vmatpush1.bf16.msra.mxu0 0
    %662 = vmatprep.subr.bf16.mxu0 0
    %663 = vmatpush1.bf16.msra.mxu0 0
    %664 = vmatprep.subr.bf16.mxu0 0
    %665 = vmatpush1.bf16.msra.mxu0 0
    %666 = vmatprep.subr.bf16.mxu0 0
    %667 = vmatpush1.bf16.msra.mxu0 0
    %668 = vmatprep.subr.bf16.mxu0 0
    %669 = vmatpush1.bf16.msra.mxu0 0
    %670 = vmatprep.subr.bf16.mxu0 %v423
    %671 = vmatpush1.bf16.msra.mxu0 %v422
    %672 = vmatprep.subr.bf16.mxu0 0
    %673 = vmatpush2.bf16.msra.mxu0 0
    %674 = vmatprep.subr.bf16.mxu0 0
    %675 = vmatpush2.bf16.msra.mxu0 0
    %676 = vmatprep.subr.bf16.mxu0 0
    %677 = vmatpush2.bf16.msra.mxu0 0
    %678 = vmatprep.subr.bf16.mxu0 0
    %679 = vmatpush2.bf16.msra.mxu0 0
    %680 = vmatprep.subr.bf16.mxu0 0
    %681 = vmatpush2.bf16.msra.mxu0 0
    %682 = vmatprep.subr.bf16.mxu0 0
    %683 = vmatpush2.bf16.msra.mxu0 0
    %684 = vmatprep.subr.bf16.mxu0 0
    %685 = vmatpush2.bf16.msra.mxu0 0
    %686 = vmatprep.subr.bf16.mxu0 0
    %687 = vmatpush2.bf16.msra.mxu0 0
    %688 = vmatprep.mubr.bf16.mxu0 0
    %689 = vmatmul.mubr.bf16.gmra.mxu0 %v434
    %v690 = vpop.f32.mrf.mxu0
    %v691 = vadd.f32 0.0, %v690
    %v692 = vpop.f32.mrf.mxu0
    %v693 = vadd.f32 0.0, %v692
    %v694 = vpop.f32.mrf.mxu0
    %v695 = vadd.f32 0.0, %v694
    %v696 = vpop.f32.mrf.mxu0
    %v697 = vadd.f32 0.0, %v696
    %698 = vmatprep.mubr.bf16.mxu0 0
    %699 = vmatmul.mubr.bf16.gmra.mxu0 %v437
    %v700 = vpop.f32.mrf.mxu0
    %v701 = vadd.f32 0.0, %v700
    %v702 = vpop.f32.mrf.mxu0
    %v703 = vadd.f32 0.0, %v702
    %v704 = vpop.f32.mrf.mxu0
    %v705 = vadd.f32 0.0, %v704
    %v706 = vpop.f32.mrf.mxu0
    %v707 = vadd.f32 0.0, %v706
    %708 = vmatprep.mubr.bf16.mxu0 0
    %709 = vmatmul.mubr.bf16.gmra.mxu0 %v440
    %v710 = vpop.f32.mrf.mxu0
    %v711 = vadd.f32 0.0, %v710
    %v712 = vpop.f32.mrf.mxu0
    %v713 = vadd.f32 0.0, %v712
    %v714 = vpop.f32.mrf.mxu0
    %v715 = vadd.f32 0.0, %v714
    %v716 = vpop.f32.mrf.mxu0
    %v717 = vadd.f32 0.0, %v716
    %718 = vmatprep.mubr.bf16.mxu0 0
    %719 = vmatmul.mubr.bf16.gmra.mxu0 %v443
    %v720 = vpop.f32.mrf.mxu0
    %v721 = vadd.f32 0.0, %v720
    %v722 = vpop.f32.mrf.mxu0
    %v723 = vadd.f32 0.0, %v722
    %v724 = vpop.f32.mrf.mxu0
    %v725 = vadd.f32 0.0, %v724
    %v726 = vpop.f32.mrf.mxu0
    %v727 = vadd.f32 0.0, %v726
    %728 = vmatprep.mubr.bf16.mxu0 0
    %729 = vmatmul.mubr.bf16.gmra.mxu0 %v446
    %v730 = vpop.f32.mrf.mxu0
    %v731 = vadd.f32 0.0, %v730
    %v732 = vpop.f32.mrf.mxu0
    %v733 = vadd.f32 0.0, %v732
    %v734 = vpop.f32.mrf.mxu0
    %v735 = vadd.f32 0.0, %v734
    %v736 = vpop.f32.mrf.mxu0
    %v737 = vadd.f32 0.0, %v736
    %738 = vmatprep.mubr.bf16.mxu0 0
    %739 = vmatmul.mubr.bf16.gmra.mxu0 %v449
    %v740 = vpop.f32.mrf.mxu0
    %v741 = vadd.f32 0.0, %v740
    %v742 = vpop.f32.mrf.mxu0
    %v743 = vadd.f32 0.0, %v742
    %v744 = vpop.f32.mrf.mxu0
    %v745 = vadd.f32 0.0, %v744
    %v746 = vpop.f32.mrf.mxu0
    %v747 = vadd.f32 0.0, %v746
    %748 = vmatprep.mubr.bf16.mxu0 0
    %749 = vmatmul.mubr.bf16.gmra.mxu0 %v452
    %v750 = vpop.f32.mrf.mxu0
    %v751 = vadd.f32 0.0, %v750
    %v752 = vpop.f32.mrf.mxu0
    %v753 = vadd.f32 0.0, %v752
    %v754 = vpop.f32.mrf.mxu0
    %v755 = vpop.f32.mrf.mxu0
    %756 = vdwg.mxu0
    %757 = vmatprep.subr.bf16.mxu0 0
    %758 = vmatpush1.bf16.msra.mxu0 0
    %759 = vmatprep.subr.bf16.mxu0 0
    %760 = vmatpush1.bf16.msra.mxu0 0
    %761 = vmatprep.subr.bf16.mxu0 0
    %762 = vmatpush1.bf16.msra.mxu0 0
    %763 = vmatprep.subr.bf16.mxu0 0
    %764 = vmatpush1.bf16.msra.mxu0 0
    %765 = vmatprep.subr.bf16.mxu0 0
    %766 = vmatpush1.bf16.msra.mxu0 0
    %767 = vmatprep.subr.bf16.mxu0 0
    %768 = vmatpush1.bf16.msra.mxu0 0
    %769 = vmatprep.subr.bf16.mxu0 0
    %770 = vmatpush1.bf16.msra.mxu0 0
    %771 = vmatprep.subr.bf16.mxu0 0
    %772 = vmatpush1.bf16.msra.mxu0 %v424
    %773 = vmatprep.subr.bf16.mxu0 0
    %774 = vmatpush2.bf16.msra.mxu0 0
    %775 = vmatprep.subr.bf16.mxu0 0
    %776 = vmatpush2.bf16.msra.mxu0 0
    %777 = vmatprep.subr.bf16.mxu0 0
    %778 = vmatpush2.bf16.msra.mxu0 0
    %779 = vmatprep.subr.bf16.mxu0 0
    %780 = vmatpush2.bf16.msra.mxu0 0
    %781 = vmatprep.subr.bf16.mxu0 0
    %782 = vmatpush2.bf16.msra.mxu0 0
    %783 = vmatprep.subr.bf16.mxu0 0
    %784 = vmatpush2.bf16.msra.mxu0 0
    %785 = vmatprep.subr.bf16.mxu0 0
    %786 = vmatpush2.bf16.msra.mxu0 0
    %787 = vmatprep.subr.bf16.mxu0 0
    %788 = vmatpush2.bf16.msra.mxu0 0
    %789 = vmatprep.mubr.bf16.mxu0 0
    %790 = vmatmul.mubr.bf16.gmra.mxu0 %v434
    %v791 = vpop.f32.mrf.mxu0
    %v792 = vadd.f32 0.0, %v791
    %v793 = vpop.f32.mrf.mxu0
    %v794 = vpop.f32.mrf.mxu0
    %v795 = vadd.f32 0.0, %v794
    %v796 = vpop.f32.mrf.mxu0
    %797 = vmatprep.mubr.bf16.mxu0 0
    %798 = vmatmul.mubr.bf16.gmra.mxu0 %v437
    %v799 = vpop.f32.mrf.mxu0
    %v800 = vadd.f32 0.0, %v799
    %v801 = vpop.f32.mrf.mxu0
    %v802 = vpop.f32.mrf.mxu0
    %v803 = vadd.f32 0.0, %v802
    %v804 = vpop.f32.mrf.mxu0
    %805 = vmatprep.mubr.bf16.mxu0 0
    %806 = vmatmul.mubr.bf16.gmra.mxu0 %v440
    %v807 = vpop.f32.mrf.mxu0
    %v808 = vadd.f32 0.0, %v807
    %v809 = vpop.f32.mrf.mxu0
    %v810 = vpop.f32.mrf.mxu0
    %v811 = vadd.f32 0.0, %v810
    %v812 = vpop.f32.mrf.mxu0
    %813 = vmatprep.mubr.bf16.mxu0 0
    %814 = vmatmul.mubr.bf16.gmra.mxu0 %v443
    %v815 = vpop.f32.mrf.mxu0
    %v816 = vadd.f32 0.0, %v815
    %v817 = vpop.f32.mrf.mxu0
    %v818 = vpop.f32.mrf.mxu0
    %v819 = vadd.f32 0.0, %v818
    %v820 = vpop.f32.mrf.mxu0
    %821 = vmatprep.mubr.bf16.mxu0 0
    %822 = vmatmul.mubr.bf16.gmra.mxu0 %v446
    %v823 = vpop.f32.mrf.mxu0
    %v824 = vadd.f32 0.0, %v823
    %v825 = vpop.f32.mrf.mxu0
    %v826 = vpop.f32.mrf.mxu0
    %v827 = vadd.f32 0.0, %v826
    %v828 = vpop.f32.mrf.mxu0
    %829 = vmatprep.mubr.bf16.mxu0 0
    %830 = vmatmul.mubr.bf16.gmra.mxu0 %v449
    %v831 = vpop.f32.mrf.mxu0
    %v832 = vadd.f32 0.0, %v831
    %v833 = vpop.f32.mrf.mxu0
    %v834 = vpop.f32.mrf.mxu0
    %v835 = vadd.f32 0.0, %v834
    %v836 = vpop.f32.mrf.mxu0
    %837 = vmatprep.mubr.bf16.mxu0 0
    %838 = vmatmul.mubr.bf16.gmra.mxu0 %v452
    %v839 = vpop.f32.mrf.mxu0
    %v840 = vadd.f32 0.0, %v839
    %v841 = vpop.f32.mrf.mxu0
    %v842 = vpop.f32.mrf.mxu0
    %v843 = vpop.f32.mrf.mxu0
    %844 = vdwg.mxu0
    %v845 = vld [vmem:[%s4] sm:$0xff]
    %v846 = vld [vmem:[%s4 + $0x8] sm:$0xff]
    %v847 = vld [vmem:[%s4 + $0x10] sm:$0xff]
    %v848 = vld [vmem:[%s4 + $0x18] sm:$0xff]
    %v849 = vld [vmem:[%s4 + $0x20] sm:$0xff]
    %v850 = vld [vmem:[%s4 + $0x28] sm:$0xff]
    %v851 = vld [vmem:[%s4 + $0x30] sm:$0xff]
    %v852 = vld [vmem:[%s4 + $0x38] sm:$0xff]
    %v853 = vld [vmem:[%s4 + $0x40] sm:$0xff]
    %v854 = vld [vmem:[%s4 + $0x48] sm:$0xff]
    %v855 = vld [vmem:[%s4 + $0x50] sm:$0xff]
    %v856 = vld [vmem:[%s4 + $0x58] sm:$0xff]
    %v857 = vld [vmem:[%s4 + $0x60] sm:$0xff]
    %v858 = vld [vmem:[%s4 + $0x68] sm:$0xff]
    %v859 = vld [vmem:[%s4 + $0x70] sm:$0xff]
    %v860 = vld [vmem:[%s4 + $0x78] sm:$0xff]
    %v861 = vld [vmem:[%s4 + $0x80] sm:$0xff]
    %v862 = vld [vmem:[%s4 + $0x88] sm:$0xff]
    %v863 = vld [vmem:[%s4 + $0x90] sm:$0xff]
    %v864 = vld [vmem:[%s4 + $0x98] sm:$0xff]
    %v865 = vld [vmem:[%s4 + $0xa0] sm:$0xff]
    %v866 = vld [vmem:[%s4 + $0xa8] sm:$0xff]
    %v867 = vld [vmem:[%s4 + $0xb0] sm:$0xff]
    %v868 = vld [vmem:[%s4 + $0xb8] sm:$0xff]
    %v869 = vld [vmem:[%s4 + $0xc0] sm:$0xff]
    %v870 = vld [vmem:[%s4 + $0xc8] sm:$0xff]
    %v871 = vld [vmem:[%s4 + $0xd0] sm:$0xff]
    %v872 = vld [vmem:[%s4 + $0xd8] sm:$0xff]
    %v873 = vld [vmem:[%s4 + $0xe0] sm:$0xff]
    %v874 = vld [vmem:[%s4 + $0xe8] sm:$0xff]
    %v875 = vld [vmem:[%s4 + $0xf0] sm:$0xff]
    %v876 = vld [vmem:[%s4 + $0xf8] sm:$0xff]
    %v877 = vld [vmem:[%s4 + $0x100] sm:$0xff]
    %v878 = vld [vmem:[%s4 + $0x108] sm:$0xff]
    %v879 = vld [vmem:[%s4 + $0x110] sm:$0xff]
    %v880 = vld [vmem:[%s4 + $0x118] sm:$0xff]
    %v881 = vld [vmem:[%s4 + $0x120] sm:$0xff]
    %v882 = vld [vmem:[%s4 + $0x128] sm:$0xff]
    %v883 = vld [vmem:[%s4 + $0x130] sm:$0xff]
    %v884 = vld [vmem:[%s4 + $0x138] sm:$0xff]
    %v885 = vld [vmem:[%s4 + $0x140] sm:$0xff]
    %v886 = vld [vmem:[%s4 + $0x148] sm:$0xff]
    %v887 = vld [vmem:[%s4 + $0x150] sm:$0xff]
    %v888 = vld [vmem:[%s4 + $0x158] sm:$0xff]
    %v889 = vld [vmem:[%s4 + $0x160] sm:$0xff]
    %v890 = vld [vmem:[%s4 + $0x168] sm:$0xff]
    %v891 = vld [vmem:[%s4 + $0x170] sm:$0xff]
    %v892 = vld [vmem:[%s4 + $0x178] sm:$0xff]
    %v893 = vld [vmem:[%s4 + $0x180] sm:$0xff]
    %v894 = vld [vmem:[%s4 + $0x188] sm:$0xff]
    %v895 = vld [vmem:[%s4 + $0x190] sm:$0xff]
    %v896 = vld [vmem:[%s4 + $0x198] sm:$0xff]
    %v897 = vld [vmem:[%s4 + $0x1a0] sm:$0xff]
    %v898 = vld [vmem:[%s4 + $0x1a8] sm:$0xff]
    %v899 = vld [vmem:[%s4 + $0x1b0] sm:$0xff]
    %v900 = vld [vmem:[%s4 + $0x1b8] sm:$0xff]
    %v901 = vld [vmem:[%s4 + $0x1c0] sm:$0xff]
    %v902 = vld [vmem:[%s4 + $0x1c8] sm:$0xff]
    %v903 = vld [vmem:[%s4 + $0x1d0] sm:$0xff]
    %v904 = vld [vmem:[%s4 + $0x1d8] sm:$0xff]
    %v905 = vld [vmem:[%s4 + $0x1e0] sm:$0xff]
    %v906 = vld [vmem:[%s4 + $0x1e8] sm:$0xff]
    %v907 = vld [vmem:[%s4 + $0x1f0] sm:$0xff]
    %v908 = vld [vmem:[%s4 + $0x1f8] sm:$0xff]
    %v909 = vld [vmem:[%s4 + $0x200] sm:$0xff]
    %v910 = vld [vmem:[%s4 + $0x208] sm:$0xff]
    %v911 = vld [vmem:[%s4 + $0x210] sm:$0xff]
    %v912 = vld [vmem:[%s4 + $0x218] sm:$0xff]
    %v913 = vld [vmem:[%s4 + $0x220] sm:$0xff]
    %v914 = vld [vmem:[%s4 + $0x228] sm:$0xff]
    %v915 = vld [vmem:[%s4 + $0x230] sm:$0xff]
    %v916 = vld [vmem:[%s4 + $0x238] sm:$0xff]
    %v917 = vld [vmem:[%s4 + $0x240] sm:$0xff]
    %v918 = vld [vmem:[%s4 + $0x248] sm:$0xff]
    %v919 = vld [vmem:[%s4 + $0x250] sm:$0xff]
    %v920 = vld [vmem:[%s4 + $0x258] sm:$0xff]
    %v921 = vld [vmem:[%s4 + $0x260] sm:$0xff]
    %v922 = vld [vmem:[%s4 + $0x268] sm:$0xff]
    %v923 = vld [vmem:[%s4 + $0x270] sm:$0xff]
    %v924 = vld [vmem:[%s4 + $0x278] sm:$0xff]
    %v925 = vld [vmem:[%s4 + $0x280] sm:$0xff]
    %v926 = vld [vmem:[%s4 + $0x288] sm:$0xff]
    %v927 = vld [vmem:[%s4 + $0x290] sm:$0xff]
    %v928 = vld [vmem:[%s4 + $0x298] sm:$0xff]
    %v929 = vld [vmem:[%s4 + $0x2a0] sm:$0x3]
    %v930 = vld [vmem:[%s4 + $0x2a8] sm:$0x3]
    %v931 = vld [vmem:[%s4 + $0x2b0] sm:$0x3]
    %v932 = vld [vmem:[%s4 + $0x2b8] sm:$0x3]
    %v933 = vld [vmem:[%s4 + $0x2c0] sm:$0x3]
    %v934 = vld [vmem:[%s4 + $0x2c8] sm:$0x3]
    %v935 = vld [vmem:[%s4 + $0x2d0] sm:$0x3]
    %v936 = vmul.f32 %v489, %v845
    %v937 = vmul.f32 %v491, %v846
    %v938 = vmul.f32 %v590, %v847
    %v939 = vmul.f32 %v592, %v848
    %v940 = vmul.f32 %v691, %v849
    %v941 = vmul.f32 %v693, %v850
    %v942 = vmul.f32 %v792, %v851
    %v943 = vmul.f32 %v493, %v852
    %v944 = vmul.f32 %v495, %v853
    %v945 = vmul.f32 %v594, %v854
    %v946 = vmul.f32 %v596, %v855
    %v947 = vmul.f32 %v695, %v856
    %v948 = vmul.f32 %v697, %v857
    %v949 = vmul.f32 %v795, %v858
    %v950 = vmul.f32 %v499, %v859
    %v951 = vmul.f32 %v501, %v860
    %v952 = vmul.f32 %v600, %v861
    %v953 = vmul.f32 %v602, %v862
    %v954 = vmul.f32 %v701, %v863
    %v955 = vmul.f32 %v703, %v864
    %v956 = vmul.f32 %v800, %v865
    %v957 = vmul.f32 %v503, %v866
    %v958 = vmul.f32 %v505, %v867
    %v959 = vmul.f32 %v604, %v868
    %v960 = vmul.f32 %v606, %v869
    %v961 = vmul.f32 %v705, %v870
    %v962 = vmul.f32 %v707, %v871
    %v963 = vmul.f32 %v803, %v872
    %v964 = vmul.f32 %v509, %v873
    %v965 = vmul.f32 %v511, %v874
    %v966 = vmul.f32 %v610, %v875
    %v967 = vmul.f32 %v612, %v876
    %v968 = vmul.f32 %v711, %v877
    %v969 = vmul.f32 %v713, %v878
    %v970 = vmul.f32 %v808, %v879
    %v971 = vmul.f32 %v513, %v880
    %v972 = vmul.f32 %v515, %v881
    %v973 = vmul.f32 %v614, %v882
    %v974 = vmul.f32 %v616, %v883
    %v975 = vmul.f32 %v715, %v884
    %v976 = vmul.f32 %v717, %v885
    %v977 = vmul.f32 %v811, %v886
    %v978 = vmul.f32 %v519, %v887
    %v979 = vmul.f32 %v521, %v888
    %v980 = vmul.f32 %v620, %v889
    %v981 = vmul.f32 %v622, %v890
    %v982 = vmul.f32 %v721, %v891
    %v983 = vmul.f32 %v723, %v892
    %v984 = vmul.f32 %v816, %v893
    %v985 = vmul.f32 %v523, %v894
    %v986 = vmul.f32 %v525, %v895
    %v987 = vmul.f32 %v624, %v896
    %v988 = vmul.f32 %v626, %v897
    %v989 = vmul.f32 %v725, %v898
    %v990 = vmul.f32 %v727, %v899
    %v991 = vmul.f32 %v819, %v900
    %v992 = vmul.f32 %v529, %v901
    %v993 = vmul.f32 %v531, %v902
    %v994 = vmul.f32 %v630, %v903
    %v995 = vmul.f32 %v632, %v904
    %v996 = vmul.f32 %v731, %v905
    %v997 = vmul.f32 %v733, %v906
    %v998 = vmul.f32 %v824, %v907
    %v999 = vmul.f32 %v533, %v908
    %v1000 = vmul.f32 %v535, %v909
    %v1001 = vmul.f32 %v634, %v910
    %v1002 = vmul.f32 %v636, %v911
    %v1003 = vmul.f32 %v735, %v912
    %v1004 = vmul.f32 %v737, %v913
    %v1005 = vmul.f32 %v827, %v914
    %v1006 = vmul.f32 %v539, %v915
    %v1007 = vmul.f32 %v541, %v916
    %v1008 = vmul.f32 %v640, %v917
    %v1009 = vmul.f32 %v642, %v918
    %v1010 = vmul.f32 %v741, %v919
    %v1011 = vmul.f32 %v743, %v920
    %v1012 = vmul.f32 %v832, %v921
    %v1013 = vmul.f32 %v543, %v922
    %v1014 = vmul.f32 %v545, %v923
    %v1015 = vmul.f32 %v644, %v924
    %v1016 = vmul.f32 %v646, %v925
    %v1017 = vmul.f32 %v745, %v926
    %v1018 = vmul.f32 %v747, %v927
    %v1019 = vmul.f32 %v835, %v928
    %v1020 = vmul.f32 %v549, %v929
    %v1021 = vmul.f32 %v551, %v930
    %v1022 = vmul.f32 %v650, %v931
    %v1023 = vmul.f32 %v652, %v932
    %v1024 = vmul.f32 %v751, %v933
    %v1025 = vmul.f32 %v753, %v934
    %v1026 = vmul.f32 %v840, %v935
    %v1027 = vld [vmem:[%s5] sm:$0x1]
    %v1028 = vpack.c.bf16 %v943, %v936
    %v1029 = vpack.c.bf16 %v944, %v937
    %v1030 = vpack.c.bf16 %v945, %v938
    %v1031 = vpack.c.bf16 %v946, %v939
    %v1032 = vpack.c.bf16 %v947, %v940
    %v1033 = vpack.c.bf16 %v948, %v941
    %v1034 = vpack.c.bf16 %v949, %v942
    %v1035 = vpack.c.bf16 %v957, %v950
    %v1036 = vpack.c.bf16 %v958, %v951
    %v1037 = vpack.c.bf16 %v959, %v952
    %v1038 = vpack.c.bf16 %v960, %v953
    %v1039 = vpack.c.bf16 %v961, %v954
    %v1040 = vpack.c.bf16 %v962, %v955
    %v1041 = vpack.c.bf16 %v963, %v956
    %v1042 = vpack.c.bf16 %v971, %v964
    %v1043 = vpack.c.bf16 %v972, %v965
    %v1044 = vpack.c.bf16 %v973, %v966
    %v1045 = vpack.c.bf16 %v974, %v967
    %v1046 = vpack.c.bf16 %v975, %v968
    %v1047 = vpack.c.bf16 %v976, %v969
    %v1048 = vpack.c.bf16 %v977, %v970
    %v1049 = vpack.c.bf16 %v985, %v978
    %v1050 = vpack.c.bf16 %v986, %v979
    %v1051 = vpack.c.bf16 %v987, %v980
    %v1052 = vpack.c.bf16 %v988, %v981
    %v1053 = vpack.c.bf16 %v989, %v982
    %v1054 = vpack.c.bf16 %v990, %v983
    %v1055 = vpack.c.bf16 %v991, %v984
    %v1056 = vpack.c.bf16 %v999, %v992
    %v1057 = vpack.c.bf16 %v1000, %v993
    %v1058 = vpack.c.bf16 %v1001, %v994
    %v1059 = vpack.c.bf16 %v1002, %v995
    %v1060 = vpack.c.bf16 %v1003, %v996
    %v1061 = vpack.c.bf16 %v1004, %v997
    %v1062 = vpack.c.bf16 %v1005, %v998
    %v1063 = vpack.c.bf16 %v1013, %v1006
    %v1064 = vpack.c.bf16 %v1014, %v1007
    %v1065 = vpack.c.bf16 %v1015, %v1008
    %v1066 = vpack.c.bf16 %v1016, %v1009
    %v1067 = vpack.c.bf16 %v1017, %v1010
    %v1068 = vpack.c.bf16 %v1018, %v1011
    %v1069 = vpack.c.bf16 %v1019, %v1012
    %v1070 = vpack.c.bf16 %v1020, %v1020
    %v1071 = vpack.c.bf16 %v1021, %v1021
    %v1072 = vpack.c.bf16 %v1022, %v1022
    %v1073 = vpack.c.bf16 %v1023, %v1023
    %v1074 = vpack.c.bf16 %v1024, %v1024
    %v1075 = vpack.c.bf16 %v1025, %v1025
    %v1076 = vpack.c.bf16 %v1026, %v1026
    %vm1077 = vcmask 801792
    %v1079 = vsel %vm1077, %v1027, 0
    %vm1081 = vcmask 1040384
    %v1083 = vsel %vm1081, %v1070, 0
    %v1086 = vsel %vm1081, %v1071, 0
    %v1089 = vsel %vm1081, %v1072, 0
    %v1092 = vsel %vm1081, %v1073, 0
    %v1095 = vsel %vm1081, %v1074, 0
    %v1098 = vsel %vm1081, %v1075, 0
    %v1101 = vsel %vm1081, %v1076, 0
    %1103 = vmatprep.subr.bf16.mxu0 0
    %1104 = vmatpush1.bf16.msra.mxu0 0
    %1105 = vmatprep.subr.bf16.mxu0 %v1086
    %1106 = vmatpush1.bf16.msra.mxu0 %v1083
    %1107 = vmatprep.subr.bf16.mxu0 %v1064
    %1108 = vmatpush1.bf16.msra.mxu0 %v1063
    %1109 = vmatprep.subr.bf16.mxu0 %v1057
    %1110 = vmatpush1.bf16.msra.mxu0 %v1056
    %1111 = vmatprep.subr.bf16.mxu0 %v1050
    %1112 = vmatpush1.bf16.msra.mxu0 %v1049
    %1113 = vmatprep.subr.bf16.mxu0 %v1043
    %1114 = vmatpush1.bf16.msra.mxu0 %v1042
    %1115 = vmatprep.subr.bf16.mxu0 %v1036
    %1116 = vmatpush1.bf16.msra.mxu0 %v1035
    %1117 = vmatprep.subr.bf16.mxu0 %v1029
    %1118 = vmatpush1.bf16.msra.mxu0 %v1028
    %1119 = vmatprep.subr.bf16.mxu0 0
    %1120 = vmatpush2.bf16.msra.mxu0 0
    %1121 = vmatprep.subr.bf16.mxu0 0
    %1122 = vmatpush2.bf16.msra.mxu0 0
    %1123 = vmatprep.subr.bf16.mxu0 0
    %1124 = vmatpush2.bf16.msra.mxu0 0
    %1125 = vmatprep.subr.bf16.mxu0 0
    %1126 = vmatpush2.bf16.msra.mxu0 0
    %1127 = vmatprep.subr.bf16.mxu0 0
    %1128 = vmatpush2.bf16.msra.mxu0 0
    %1129 = vmatprep.subr.bf16.mxu0 0
    %1130 = vmatpush2.bf16.msra.mxu0 0
    %1131 = vmatprep.subr.bf16.mxu0 0
    %1132 = vmatpush2.bf16.msra.mxu0 0
    %1133 = vmatprep.subr.bf16.mxu0 0
    %1134 = vmatpush2.bf16.msra.mxu0 0
    %1135 = vmatprep.mubr.bf16.mxu0 0
    %1136 = vmatmul.mubr.bf16.gmra.mxu0 %v1079
    %v1137 = vpop.f32.mrf.mxu0
    %v1138 = vadd.f32 0.0, %v1137
    %v1139 = vpop.f32.mrf.mxu0
    %v1140 = vadd.f32 0.0, %v1139
    %v1141 = vpop.f32.mrf.mxu0
    %v1142 = vpop.f32.mrf.mxu0
    %1143 = vdwg.mxu0
    %1144 = vmatprep.subr.bf16.mxu0 0
    %1145 = vmatpush1.bf16.msra.mxu0 0
    %1146 = vmatprep.subr.bf16.mxu0 %v1092
    %1147 = vmatpush1.bf16.msra.mxu0 %v1089
    %1148 = vmatprep.subr.bf16.mxu0 %v1066
    %1149 = vmatpush1.bf16.msra.mxu0 %v1065
    %1150 = vmatprep.subr.bf16.mxu0 %v1059
    %1151 = vmatpush1.bf16.msra.mxu0 %v1058
    %1152 = vmatprep.subr.bf16.mxu0 %v1052
    %1153 = vmatpush1.bf16.msra.mxu0 %v1051
    %1154 = vmatprep.subr.bf16.mxu0 %v1045
    %1155 = vmatpush1.bf16.msra.mxu0 %v1044
    %1156 = vmatprep.subr.bf16.mxu0 %v1038
    %1157 = vmatpush1.bf16.msra.mxu0 %v1037
    %1158 = vmatprep.subr.bf16.mxu0 %v1031
    %1159 = vmatpush1.bf16.msra.mxu0 %v1030
    %1160 = vmatprep.subr.bf16.mxu0 0
    %1161 = vmatpush2.bf16.msra.mxu0 0
    %1162 = vmatprep.subr.bf16.mxu0 0
    %1163 = vmatpush2.bf16.msra.mxu0 0
    %1164 = vmatprep.subr.bf16.mxu0 0
    %1165 = vmatpush2.bf16.msra.mxu0 0
    %1166 = vmatprep.subr.bf16.mxu0 0
    %1167 = vmatpush2.bf16.msra.mxu0 0
    %1168 = vmatprep.subr.bf16.mxu0 0
    %1169 = vmatpush2.bf16.msra.mxu0 0
    %1170 = vmatprep.subr.bf16.mxu0 0
    %1171 = vmatpush2.bf16.msra.mxu0 0
    %1172 = vmatprep.subr.bf16.mxu0 0
    %1173 = vmatpush2.bf16.msra.mxu0 0
    %1174 = vmatprep.subr.bf16.mxu0 0
    %1175 = vmatpush2.bf16.msra.mxu0 0
    %1176 = vmatprep.mubr.bf16.mxu0 0
    %1177 = vmatmul.mubr.bf16.gmra.mxu0 %v1079
    %v1178 = vpop.f32.mrf.mxu0
    %v1179 = vadd.f32 0.0, %v1178
    %v1180 = vpop.f32.mrf.mxu0
    %v1181 = vadd.f32 0.0, %v1180
    %v1182 = vpop.f32.mrf.mxu0
    %v1183 = vpop.f32.mrf.mxu0
    %1184 = vdwg.mxu0
    %1185 = vmatprep.subr.bf16.mxu0 0
    %1186 = vmatpush1.bf16.msra.mxu0 0
    %1187 = vmatprep.subr.bf16.mxu0 %v1098
    %1188 = vmatpush1.bf16.msra.mxu0 %v1095
    %1189 = vmatprep.subr.bf16.mxu0 %v1068
    %1190 = vmatpush1.bf16.msra.mxu0 %v1067
    %1191 = vmatprep.subr.bf16.mxu0 %v1061
    %1192 = vmatpush1.bf16.msra.mxu0 %v1060
    %1193 = vmatprep.subr.bf16.mxu0 %v1054
    %1194 = vmatpush1.bf16.msra.mxu0 %v1053
    %1195 = vmatprep.subr.bf16.mxu0 %v1047
    %1196 = vmatpush1.bf16.msra.mxu0 %v1046
    %1197 = vmatprep.subr.bf16.mxu0 %v1040
    %1198 = vmatpush1.bf16.msra.mxu0 %v1039
    %1199 = vmatprep.subr.bf16.mxu0 %v1033
    %1200 = vmatpush1.bf16.msra.mxu0 %v1032
    %1201 = vmatprep.subr.bf16.mxu0 0
    %1202 = vmatpush2.bf16.msra.mxu0 0
    %1203 = vmatprep.subr.bf16.mxu0 0
    %1204 = vmatpush2.bf16.msra.mxu0 0
    %1205 = vmatprep.subr.bf16.mxu0 0
    %1206 = vmatpush2.bf16.msra.mxu0 0
    %1207 = vmatprep.subr.bf16.mxu0 0
    %1208 = vmatpush2.bf16.msra.mxu0 0
    %1209 = vmatprep.subr.bf16.mxu0 0
    %1210 = vmatpush2.bf16.msra.mxu0 0
    %1211 = vmatprep.subr.bf16.mxu0 0
    %1212 = vmatpush2.bf16.msra.mxu0 0
    %1213 = vmatprep.subr.bf16.mxu0 0
    %1214 = vmatpush2.bf16.msra.mxu0 0
    %1215 = vmatprep.subr.bf16.mxu0 0
    %1216 = vmatpush2.bf16.msra.mxu0 0
    %1217 = vmatprep.mubr.bf16.mxu0 0
    %1218 = vmatmul.mubr.bf16.gmra.mxu0 %v1079
    %v1219 = vpop.f32.mrf.mxu0
    %v1220 = vadd.f32 0.0, %v1219
    %v1221 = vpop.f32.mrf.mxu0
    %v1222 = vadd.f32 0.0, %v1221
    %v1223 = vpop.f32.mrf.mxu0
    %v1224 = vpop.f32.mrf.mxu0
    %1225 = vdwg.mxu0
    %1226 = vmatprep.subr.bf16.mxu0 0
    %1227 = vmatpush1.bf16.msra.mxu0 0
    %1228 = vmatprep.subr.bf16.mxu0 0
    %1229 = vmatpush1.bf16.msra.mxu0 %v1101
    %1230 = vmatprep.subr.bf16.mxu0 0
    %1231 = vmatpush1.bf16.msra.mxu0 %v1069
    %1232 = vmatprep.subr.bf16.mxu0 0
    %1233 = vmatpush1.bf16.msra.mxu0 %v1062
    %1234 = vmatprep.subr.bf16.mxu0 0
    %1235 = vmatpush1.bf16.msra.mxu0 %v1055
    %1236 = vmatprep.subr.bf16.mxu0 0
    %1237 = vmatpush1.bf16.msra.mxu0 %v1048
    %1238 = vmatprep.subr.bf16.mxu0 0
    %1239 = vmatpush1.bf16.msra.mxu0 %v1041
    %1240 = vmatprep.subr.bf16.mxu0 0
    %1241 = vmatpush1.bf16.msra.mxu0 %v1034
    %1242 = vmatprep.subr.bf16.mxu0 0
    %1243 = vmatpush2.bf16.msra.mxu0 0
    %1244 = vmatprep.subr.bf16.mxu0 0
    %1245 = vmatpush2.bf16.msra.mxu0 0
    %1246 = vmatprep.subr.bf16.mxu0 0
    %1247 = vmatpush2.bf16.msra.mxu0 0
    %1248 = vmatprep.subr.bf16.mxu0 0
    %1249 = vmatpush2.bf16.msra.mxu0 0
    %1250 = vmatprep.subr.bf16.mxu0 0
    %1251 = vmatpush2.bf16.msra.mxu0 0
    %1252 = vmatprep.subr.bf16.mxu0 0
    %1253 = vmatpush2.bf16.msra.mxu0 0
    %1254 = vmatprep.subr.bf16.mxu0 0
    %1255 = vmatpush2.bf16.msra.mxu0 0
    %1256 = vmatprep.subr.bf16.mxu0 0
    %1257 = vmatpush2.bf16.msra.mxu0 0
    %1258 = vmatprep.mubr.bf16.mxu0 0
    %1259 = vmatmul.mubr.bf16.gmra.mxu0 %v1079
    %v1260 = vpop.f32.mrf.mxu0
    %v1261 = vadd.f32 0.0, %v1260
    %v1262 = vpop.f32.mrf.mxu0
    %v1263 = vpop.f32.mrf.mxu0
    %v1264 = vpop.f32.mrf.mxu0
    %1265 = vdwg.mxu0
    %v1266 = vpack.c.bf16 %v1138, %v1138
    %v1267 = vpack.c.bf16 %v1140, %v1140
    %v1268 = vpack.c.bf16 %v1179, %v1179
    %v1269 = vpack.c.bf16 %v1181, %v1181
    %v1270 = vpack.c.bf16 %v1220, %v1220
    %v1271 = vpack.c.bf16 %v1222, %v1222
    %v1272 = vpack.c.bf16 %v1261, %v1261
    %v1273 = vld [vmem:[%s6] sm:$0xf]
    %v1274 = vld [vmem:[%s6 + $0x4] sm:$0xf]
    %v1275 = vld [vmem:[%s6 + $0x8] sm:$0xf]
    %v1276 = vld [vmem:[%s6 + $0xc] sm:$0xf]
    %v1277 = vld [vmem:[%s6 + $0x10] sm:$0xf]
    %v1278 = vld [vmem:[%s6 + $0x14] sm:$0xf]
    %v1279 = vld [vmem:[%s6 + $0x18] sm:$0xf]
    %v1280 = vld [vmem:[%s6 + $0x1c] sm:$0xf]
    %v1281 = vld [vmem:[%s6 + $0x20] sm:$0xf]
    %v1282 = vld [vmem:[%s6 + $0x24] sm:$0xf]
    %v1283 = vld [vmem:[%s6 + $0x28] sm:$0xf]
    %v1284 = vld [vmem:[%s6 + $0x2c] sm:$0xf]
    %v1285 = vld [vmem:[%s6 + $0x30] sm:$0xf]
    %v1286 = vld [vmem:[%s6 + $0x34] sm:$0xf]
    %v1287 = vld [vmem:[%s6 + $0x38] sm:$0xf]
    %v1288 = vld [vmem:[%s6 + $0x3c] sm:$0xf]
    %v1289 = vld [vmem:[%s6 + $0x40] sm:$0xf]
    %v1290 = vld [vmem:[%s6 + $0x44] sm:$0xf]
    %v1291 = vld [vmem:[%s6 + $0x48] sm:$0xf]
    %v1292 = vld [vmem:[%s6 + $0x4c] sm:$0xf]
    %v1293 = vld [vmem:[%s6 + $0x50] sm:$0xf]
    %v1294 = vld [vmem:[%s6 + $0x54] sm:$0xf]
    %v1295 = vld [vmem:[%s6 + $0x58] sm:$0xf]
    %v1296 = vld [vmem:[%s6 + $0x5c] sm:$0xf]
    %v1297 = vld [vmem:[%s6 + $0x60] sm:$0xf]
    %v1298 = vld [vmem:[%s6 + $0x64] sm:$0xf]
    %v1299 = vld [vmem:[%s6 + $0x68] sm:$0xf]
    %v1300 = vld [vmem:[%s6 + $0x6c] sm:$0xf]
    %v1301 = vld [vmem:[%s6 + $0x70] sm:$0xf]
    %v1302 = vld [vmem:[%s6 + $0x74] sm:$0xf]
    %v1303 = vld [vmem:[%s6 + $0x78] sm:$0xf]
    %v1304 = vld [vmem:[%s6 + $0x7c] sm:$0xf]
    %v1305 = vld [vmem:[%s6 + $0x80] sm:$0xf]
    %v1306 = vld [vmem:[%s6 + $0x84] sm:$0xf]
    %v1307 = vld [vmem:[%s6 + $0x88] sm:$0xf]
    %v1308 = vld [vmem:[%s6 + $0x8c] sm:$0xf]
    %v1309 = vld [vmem:[%s6 + $0x90] sm:$0xf]
    %v1310 = vld [vmem:[%s6 + $0x94] sm:$0xf]
    %v1311 = vld [vmem:[%s6 + $0x98] sm:$0xf]
    %v1312 = vld [vmem:[%s6 + $0x9c] sm:$0xf]
    %v1313 = vld [vmem:[%s6 + $0xa0] sm:$0xf]
    %v1314 = vld [vmem:[%s6 + $0xa4] sm:$0xf]
    %v1315 = vld [vmem:[%s6 + $0xa8] sm:$0xf]
    %v1316 = vld [vmem:[%s6 + $0xac] sm:$0xf]
    %v1317 = vld [vmem:[%s6 + $0xb0] sm:$0xf]
    %v1318 = vld [vmem:[%s6 + $0xb4] sm:$0xf]
    %v1319 = vld [vmem:[%s6 + $0xb8] sm:$0xf]
    %v1320 = vld [vmem:[%s6 + $0xbc] sm:$0xf]
    %v1321 = vld [vmem:[%s6 + $0xc0] sm:$0xf]
    %v1322 = vld [vmem:[%s6 + $0xc4] sm:$0xf]
    %v1323 = vld [vmem:[%s6 + $0xc8] sm:$0xf]
    %v1324 = vld [vmem:[%s6 + $0xcc] sm:$0xf]
    %v1325 = vld [vmem:[%s6 + $0xd0] sm:$0xf]
    %v1326 = vld [vmem:[%s6 + $0xd4] sm:$0xf]
    %v1327 = vld [vmem:[%s6 + $0xd8] sm:$0xf]
    %v1328 = vld [vmem:[%s6 + $0xdc] sm:$0xf]
    %v1329 = vld [vmem:[%s6 + $0xe0] sm:$0xf]
    %v1330 = vld [vmem:[%s6 + $0xe4] sm:$0xf]
    %v1331 = vld [vmem:[%s6 + $0xe8] sm:$0xf]
    %v1332 = vld [vmem:[%s6 + $0xec] sm:$0xf]
    %v1333 = vld [vmem:[%s6 + $0xf0] sm:$0xf]
    %v1334 = vld [vmem:[%s6 + $0xf4] sm:$0xf]
    %v1335 = vld [vmem:[%s6 + $0xf8] sm:$0xf]
    %v1336 = vld [vmem:[%s6 + $0xfc] sm:$0xf]
    %v1337 = vld [vmem:[%s6 + $0x100] sm:$0xf]
    %v1338 = vld [vmem:[%s6 + $0x104] sm:$0xf]
    %v1339 = vld [vmem:[%s6 + $0x108] sm:$0xf]
    %v1340 = vld [vmem:[%s6 + $0x10c] sm:$0xf]
    %v1341 = vld [vmem:[%s6 + $0x110] sm:$0xf]
    %v1342 = vld [vmem:[%s6 + $0x114] sm:$0xf]
    %v1343 = vld [vmem:[%s6 + $0x118] sm:$0xf]
    %v1344 = vld [vmem:[%s6 + $0x11c] sm:$0xf]
    %v1345 = vld [vmem:[%s6 + $0x120] sm:$0xf]
    %v1346 = vld [vmem:[%s6 + $0x124] sm:$0xf]
    %v1347 = vld [vmem:[%s6 + $0x128] sm:$0xf]
    %v1348 = vld [vmem:[%s6 + $0x12c] sm:$0xf]
    %v1349 = vld [vmem:[%s6 + $0x130] sm:$0xf]
    %v1350 = vld [vmem:[%s6 + $0x134] sm:$0xf]
    %v1351 = vld [vmem:[%s6 + $0x138] sm:$0xf]
    %v1352 = vld [vmem:[%s6 + $0x13c] sm:$0xf]
    %v1353 = vld [vmem:[%s6 + $0x140] sm:$0xf]
    %v1354 = vld [vmem:[%s6 + $0x144] sm:$0xf]
    %v1355 = vld [vmem:[%s6 + $0x148] sm:$0xf]
    %v1356 = vld [vmem:[%s6 + $0x14c] sm:$0xf]
    %v1357 = vld [vmem:[%s6 + $0x150] sm:$0xf]
    %v1358 = vld [vmem:[%s6 + $0x154] sm:$0xf]
    %v1359 = vld [vmem:[%s6 + $0x158] sm:$0xf]
    %v1360 = vld [vmem:[%s6 + $0x15c] sm:$0xf]
    %v1361 = vld [vmem:[%s6 + $0x160] sm:$0xf]
    %v1362 = vld [vmem:[%s6 + $0x164] sm:$0xf]
    %v1363 = vld [vmem:[%s6 + $0x168] sm:$0xf]
    %v1364 = vld [vmem:[%s6 + $0x16c] sm:$0xf]
    %v1365 = vld [vmem:[%s6 + $0x170] sm:$0xf]
    %v1366 = vld [vmem:[%s6 + $0x174] sm:$0xf]
    %v1367 = vld [vmem:[%s6 + $0x178] sm:$0xf]
    %v1368 = vld [vmem:[%s6 + $0x17c] sm:$0xf]
    %v1369 = vld [vmem:[%s6 + $0x180] sm:$0xf]
    %v1370 = vld [vmem:[%s6 + $0x184] sm:$0xf]
    %v1371 = vld [vmem:[%s7] sm:$0x1]
    %v1373 = vlaneseq
    %v1374 = vshrl.u32 %v1373, 7
    %v1375 = vsub.s32 0, %v1374
    %v1376 = vrot.slane %v1371, %v1375
    %v1476 = vunpack.c.l.b16 %v1273
    %v1477 = vunpack.c.l.b16 %v1274
    %v1478 = vunpack.c.l.b16 %v1275
    %v1479 = vunpack.c.l.b16 %v1276
    %v1480 = vunpack.c.l.b16 %v1277
    %v1481 = vunpack.c.l.b16 %v1278
    %v1482 = vunpack.c.l.b16 %v1279
    %v1483 = vunpack.c.l.b16 %v1280
    %v1484 = vunpack.c.l.b16 %v1281
    %v1485 = vunpack.c.l.b16 %v1282
    %v1486 = vunpack.c.l.b16 %v1283
    %v1487 = vunpack.c.l.b16 %v1284
    %v1488 = vunpack.c.l.b16 %v1285
    %v1489 = vunpack.c.l.b16 %v1286
    %v1490 = vunpack.c.l.b16 %v1287
    %v1491 = vunpack.c.l.b16 %v1288
    %v1492 = vunpack.c.l.b16 %v1289
    %v1493 = vunpack.c.l.b16 %v1290
    %v1494 = vunpack.c.l.b16 %v1291
    %v1495 = vunpack.c.l.b16 %v1292
    %v1496 = vunpack.c.l.b16 %v1293
    %v1497 = vunpack.c.l.b16 %v1294
    %v1498 = vunpack.c.l.b16 %v1295
    %v1499 = vunpack.c.l.b16 %v1296
    %v1500 = vunpack.c.l.b16 %v1297
    %v1501 = vunpack.c.l.b16 %v1298
    %v1502 = vunpack.c.l.b16 %v1299
    %v1503 = vunpack.c.l.b16 %v1300
    %v1504 = vunpack.c.l.b16 %v1301
    %v1505 = vunpack.c.l.b16 %v1302
    %v1506 = vunpack.c.l.b16 %v1303
    %v1507 = vunpack.c.l.b16 %v1304
    %v1508 = vunpack.c.l.b16 %v1305
    %v1509 = vunpack.c.l.b16 %v1306
    %v1510 = vunpack.c.l.b16 %v1307
    %v1511 = vunpack.c.l.b16 %v1308
    %v1512 = vunpack.c.l.b16 %v1309
    %v1513 = vunpack.c.l.b16 %v1310
    %v1514 = vunpack.c.l.b16 %v1311
    %v1515 = vunpack.c.l.b16 %v1312
    %v1516 = vunpack.c.l.b16 %v1313
    %v1517 = vunpack.c.l.b16 %v1314
    %v1518 = vunpack.c.l.b16 %v1315
    %v1519 = vunpack.c.l.b16 %v1316
    %v1520 = vunpack.c.l.b16 %v1317
    %v1521 = vunpack.c.l.b16 %v1318
    %v1522 = vunpack.c.l.b16 %v1319
    %v1523 = vunpack.c.l.b16 %v1320
    %v1524 = vunpack.c.l.b16 %v1321
    %v1525 = vunpack.c.l.b16 %v1322
    %v1526 = vunpack.c.l.b16 %v1323
    %v1527 = vunpack.c.l.b16 %v1324
    %v1528 = vunpack.c.l.b16 %v1325
    %v1529 = vunpack.c.l.b16 %v1326
    %v1530 = vunpack.c.l.b16 %v1327
    %v1531 = vunpack.c.l.b16 %v1328
    %v1532 = vunpack.c.l.b16 %v1329
    %v1533 = vunpack.c.l.b16 %v1330
    %v1534 = vunpack.c.l.b16 %v1331
    %v1535 = vunpack.c.l.b16 %v1332
    %v1536 = vunpack.c.l.b16 %v1333
    %v1537 = vunpack.c.l.b16 %v1334
    %v1538 = vunpack.c.l.b16 %v1335
    %v1539 = vunpack.c.l.b16 %v1336
    %v1540 = vunpack.c.l.b16 %v1337
    %v1541 = vunpack.c.l.b16 %v1338
    %v1542 = vunpack.c.l.b16 %v1339
    %v1543 = vunpack.c.l.b16 %v1340
    %v1544 = vunpack.c.l.b16 %v1341
    %v1545 = vunpack.c.l.b16 %v1342
    %v1546 = vunpack.c.l.b16 %v1343
    %v1547 = vunpack.c.l.b16 %v1344
    %v1548 = vunpack.c.l.b16 %v1345
    %v1549 = vunpack.c.l.b16 %v1346
    %v1550 = vunpack.c.l.b16 %v1347
    %v1551 = vunpack.c.l.b16 %v1348
    %v1552 = vunpack.c.l.b16 %v1349
    %v1553 = vunpack.c.l.b16 %v1350
    %v1554 = vunpack.c.l.b16 %v1351
    %v1555 = vunpack.c.l.b16 %v1352
    %v1556 = vunpack.c.l.b16 %v1353
    %v1557 = vunpack.c.l.b16 %v1354
    %v1558 = vunpack.c.l.b16 %v1355
    %v1559 = vunpack.c.l.b16 %v1356
    %v1560 = vunpack.c.l.b16 %v1357
    %v1561 = vunpack.c.l.b16 %v1358
    %v1562 = vunpack.c.l.b16 %v1359
    %v1563 = vunpack.c.l.b16 %v1360
    %v1564 = vunpack.c.l.b16 %v1361
    %v1565 = vunpack.c.l.b16 %v1362
    %v1566 = vunpack.c.l.b16 %v1363
    %v1567 = vunpack.c.l.b16 %v1364
    %v1568 = vunpack.c.l.b16 %v1365
    %v1569 = vunpack.c.l.b16 %v1366
    %v1570 = vunpack.c.l.b16 %v1367
    %v1571 = vunpack.c.l.b16 %v1368
    %v1572 = vunpack.c.l.b16 %v1369
    %v1573 = vunpack.c.l.b16 %v1370
    %v1574 = vpack.c.b16 %v1477, %v1476
    %v1575 = vpack.c.b16 %v1479, %v1478
    %v1576 = vpack.c.b16 %v1481, %v1480
    %v1577 = vpack.c.b16 %v1483, %v1482
    %v1578 = vpack.c.b16 %v1485, %v1484
    %v1579 = vpack.c.b16 %v1487, %v1486
    %v1580 = vpack.c.b16 %v1489, %v1488
    %v1581 = vpack.c.b16 %v1491, %v1490
    %v1582 = vpack.c.b16 %v1493, %v1492
    %v1583 = vpack.c.b16 %v1495, %v1494
    %v1584 = vpack.c.b16 %v1497, %v1496
    %v1585 = vpack.c.b16 %v1499, %v1498
    %v1586 = vpack.c.b16 %v1501, %v1500
    %v1587 = vpack.c.b16 %v1503, %v1502
    %v1588 = vpack.c.b16 %v1505, %v1504
    %v1589 = vpack.c.b16 %v1507, %v1506
    %v1590 = vpack.c.b16 %v1509, %v1508
    %v1591 = vpack.c.b16 %v1511, %v1510
    %v1592 = vpack.c.b16 %v1513, %v1512
    %v1593 = vpack.c.b16 %v1515, %v1514
    %v1594 = vpack.c.b16 %v1517, %v1516
    %v1595 = vpack.c.b16 %v1519, %v1518
    %v1596 = vpack.c.b16 %v1521, %v1520
    %v1597 = vpack.c.b16 %v1523, %v1522
    %v1598 = vpack.c.b16 %v1525, %v1524
    %v1599 = vpack.c.b16 %v1527, %v1526
    %v1600 = vpack.c.b16 %v1529, %v1528
    %v1601 = vpack.c.b16 %v1531, %v1530
    %v1602 = vpack.c.b16 %v1533, %v1532
    %v1603 = vpack.c.b16 %v1535, %v1534
    %v1604 = vpack.c.b16 %v1537, %v1536
    %v1605 = vpack.c.b16 %v1539, %v1538
    %v1606 = vpack.c.b16 %v1541, %v1540
    %v1607 = vpack.c.b16 %v1543, %v1542
    %v1608 = vpack.c.b16 %v1545, %v1544
    %v1609 = vpack.c.b16 %v1547, %v1546
    %v1610 = vpack.c.b16 %v1549, %v1548
    %v1611 = vpack.c.b16 %v1551, %v1550
    %v1612 = vpack.c.b16 %v1553, %v1552
    %v1613 = vpack.c.b16 %v1555, %v1554
    %v1614 = vpack.c.b16 %v1557, %v1556
    %v1615 = vpack.c.b16 %v1559, %v1558
    %v1616 = vpack.c.b16 %v1561, %v1560
    %v1617 = vpack.c.b16 %v1563, %v1562
    %v1618 = vpack.c.b16 %v1565, %v1564
    %v1619 = vpack.c.b16 %v1567, %v1566
    %v1620 = vpack.c.b16 %v1569, %v1568
    %v1621 = vpack.c.b16 %v1571, %v1570
    %v1622 = vpack.c.b16 %v1573, %v1572
    %v1673 = vsel %vm432, %v1272, 0
    %1675 = vmatprep.subr.bf16.mxu0 0
    %1676 = vmatpush1.bf16.msra.mxu0 %v1581
    %1677 = vmatprep.subr.bf16.mxu0 0
    %1678 = vmatpush1.bf16.msra.mxu0 %v1580
    %1679 = vmatprep.subr.bf16.mxu0 0
    %1680 = vmatpush1.bf16.msra.mxu0 %v1579
    %1681 = vmatprep.subr.bf16.mxu0 0
    %1682 = vmatpush1.bf16.msra.mxu0 %v1578
    %1683 = vmatprep.subr.bf16.mxu0 0
    %1684 = vmatpush1.bf16.msra.mxu0 %v1577
    %1685 = vmatprep.subr.bf16.mxu0 0
    %1686 = vmatpush1.bf16.msra.mxu0 %v1576
    %1687 = vmatprep.subr.bf16.mxu0 0
    %1688 = vmatpush1.bf16.msra.mxu0 %v1575
    %1689 = vmatprep.subr.bf16.mxu0 0
    %1690 = vmatpush1.bf16.msra.mxu0 %v1574
    %1691 = vmatprep.subr.bf16.mxu0 0
    %1692 = vmatpush2.bf16.msra.mxu0 %v1589
    %1693 = vmatprep.subr.bf16.mxu0 0
    %1694 = vmatpush2.bf16.msra.mxu0 %v1588
    %1695 = vmatprep.subr.bf16.mxu0 0
    %1696 = vmatpush2.bf16.msra.mxu0 %v1587
    %1697 = vmatprep.subr.bf16.mxu0 0
    %1698 = vmatpush2.bf16.msra.mxu0 %v1586
    %1699 = vmatprep.subr.bf16.mxu0 0
    %1700 = vmatpush2.bf16.msra.mxu0 %v1585
    %1701 = vmatprep.subr.bf16.mxu0 0
    %1702 = vmatpush2.bf16.msra.mxu0 %v1584
    %1703 = vmatprep.subr.bf16.mxu0 0
    %1704 = vmatpush2.bf16.msra.mxu0 %v1583
    %1705 = vmatprep.subr.bf16.mxu0 0
    %1706 = vmatpush2.bf16.msra.mxu0 %v1582
    %1707 = vmatprep.mubr.bf16.mxu0 %v1267
    %1708 = vmatmul.mubr.bf16.gmra.mxu0 %v1266
    %v1709 = vpop.f32.mrf.mxu0
    %v1710 = vadd.f32 %v1376, %v1709
    %v1711 = vpop.f32.mrf.mxu0
    %v1712 = vpop.f32.mrf.mxu0
    %v1713 = vpop.f32.mrf.mxu0
    %1714 = vdwg.mxu0
    %1715 = vmatprep.subr.bf16.mxu0 0
    %1716 = vmatpush1.bf16.msra.mxu0 %v1597
    %1717 = vmatprep.subr.bf16.mxu0 0
    %1718 = vmatpush1.bf16.msra.mxu0 %v1596
    %1719 = vmatprep.subr.bf16.mxu0 0
    %1720 = vmatpush1.bf16.msra.mxu0 %v1595
    %1721 = vmatprep.subr.bf16.mxu0 0
    %1722 = vmatpush1.bf16.msra.mxu0 %v1594
    %1723 = vmatprep.subr.bf16.mxu0 0
    %1724 = vmatpush1.bf16.msra.mxu0 %v1593
    %1725 = vmatprep.subr.bf16.mxu0 0
    %1726 = vmatpush1.bf16.msra.mxu0 %v1592
    %1727 = vmatprep.subr.bf16.mxu0 0
    %1728 = vmatpush1.bf16.msra.mxu0 %v1591
    %1729 = vmatprep.subr.bf16.mxu0 0
    %1730 = vmatpush1.bf16.msra.mxu0 %v1590
    %1731 = vmatprep.subr.bf16.mxu0 0
    %1732 = vmatpush2.bf16.msra.mxu0 %v1605
    %1733 = vmatprep.subr.bf16.mxu0 0
    %1734 = vmatpush2.bf16.msra.mxu0 %v1604
    %1735 = vmatprep.subr.bf16.mxu0 0
    %1736 = vmatpush2.bf16.msra.mxu0 %v1603
    %1737 = vmatprep.subr.bf16.mxu0 0
    %1738 = vmatpush2.bf16.msra.mxu0 %v1602
    %1739 = vmatprep.subr.bf16.mxu0 0
    %1740 = vmatpush2.bf16.msra.mxu0 %v1601
    %1741 = vmatprep.subr.bf16.mxu0 0
    %1742 = vmatpush2.bf16.msra.mxu0 %v1600
    %1743 = vmatprep.subr.bf16.mxu0 0
    %1744 = vmatpush2.bf16.msra.mxu0 %v1599
    %1745 = vmatprep.subr.bf16.mxu0 0
    %1746 = vmatpush2.bf16.msra.mxu0 %v1598
    %1747 = vmatprep.mubr.bf16.mxu0 %v1269
    %1748 = vmatmul.mubr.bf16.gmra.mxu0 %v1268
    %v1749 = vpop.f32.mrf.mxu0
    %v1750 = vadd.f32 %v1710, %v1749
    %v1751 = vpop.f32.mrf.mxu0
    %v1752 = vpop.f32.mrf.mxu0
    %v1753 = vpop.f32.mrf.mxu0
    %1754 = vdwg.mxu0
    %1755 = vmatprep.subr.bf16.mxu0 0
    %1756 = vmatpush1.bf16.msra.mxu0 %v1613
    %1757 = vmatprep.subr.bf16.mxu0 0
    %1758 = vmatpush1.bf16.msra.mxu0 %v1612
    %1759 = vmatprep.subr.bf16.mxu0 0
    %1760 = vmatpush1.bf16.msra.mxu0 %v1611
    %1761 = vmatprep.subr.bf16.mxu0 0
    %1762 = vmatpush1.bf16.msra.mxu0 %v1610
    %1763 = vmatprep.subr.bf16.mxu0 0
    %1764 = vmatpush1.bf16.msra.mxu0 %v1609
    %1765 = vmatprep.subr.bf16.mxu0 0
    %1766 = vmatpush1.bf16.msra.mxu0 %v1608
    %1767 = vmatprep.subr.bf16.mxu0 0
    %1768 = vmatpush1.bf16.msra.mxu0 %v1607
    %1769 = vmatprep.subr.bf16.mxu0 0
    %1770 = vmatpush1.bf16.msra.mxu0 %v1606
    %1771 = vmatprep.subr.bf16.mxu0 0
    %1772 = vmatpush2.bf16.msra.mxu0 %v1621
    %1773 = vmatprep.subr.bf16.mxu0 0
    %1774 = vmatpush2.bf16.msra.mxu0 %v1620
    %1775 = vmatprep.subr.bf16.mxu0 0
    %1776 = vmatpush2.bf16.msra.mxu0 %v1619
    %1777 = vmatprep.subr.bf16.mxu0 0
    %1778 = vmatpush2.bf16.msra.mxu0 %v1618
    %1779 = vmatprep.subr.bf16.mxu0 0
    %1780 = vmatpush2.bf16.msra.mxu0 %v1617
    %1781 = vmatprep.subr.bf16.mxu0 0
    %1782 = vmatpush2.bf16.msra.mxu0 %v1616
    %1783 = vmatprep.subr.bf16.mxu0 0
    %1784 = vmatpush2.bf16.msra.mxu0 %v1615
    %1785 = vmatprep.subr.bf16.mxu0 0
    %1786 = vmatpush2.bf16.msra.mxu0 %v1614
    %1787 = vmatprep.mubr.bf16.mxu0 %v1271
    %1788 = vmatmul.mubr.bf16.gmra.mxu0 %v1270
    %v1789 = vpop.f32.mrf.mxu0
    %v1790 = vadd.f32 %v1750, %v1789
    %v1791 = vpop.f32.mrf.mxu0
    %v1792 = vpop.f32.mrf.mxu0
    %v1793 = vpop.f32.mrf.mxu0
    %1794 = vdwg.mxu0
    %1795 = vmatprep.subr.bf16.mxu0 0
    %1796 = vmatpush1.bf16.msra.mxu0 0
    %1797 = vmatprep.subr.bf16.mxu0 0
    %1798 = vmatpush1.bf16.msra.mxu0 0
    %1799 = vmatprep.subr.bf16.mxu0 0
    %1800 = vmatpush1.bf16.msra.mxu0 0
    %1801 = vmatprep.subr.bf16.mxu0 0
    %1802 = vmatpush1.bf16.msra.mxu0 0
    %1803 = vmatprep.subr.bf16.mxu0 0
    %1804 = vmatpush1.bf16.msra.mxu0 0
    %1805 = vmatprep.subr.bf16.mxu0 0
    %1806 = vmatpush1.bf16.msra.mxu0 0
    %1807 = vmatprep.subr.bf16.mxu0 0
    %1808 = vmatpush1.bf16.msra.mxu0 0
    %1809 = vmatprep.subr.bf16.mxu0 0
    %1810 = vmatpush1.bf16.msra.mxu0 %v1622
    %1811 = vmatprep.subr.bf16.mxu0 0
    %1812 = vmatpush2.bf16.msra.mxu0 0
    %1813 = vmatprep.subr.bf16.mxu0 0
    %1814 = vmatpush2.bf16.msra.mxu0 0
    %1815 = vmatprep.subr.bf16.mxu0 0
    %1816 = vmatpush2.bf16.msra.mxu0 0
    %1817 = vmatprep.subr.bf16.mxu0 0
    %1818 = vmatpush2.bf16.msra.mxu0 0
    %1819 = vmatprep.subr.bf16.mxu0 0
    %1820 = vmatpush2.bf16.msra.mxu0 0
    %1821 = vmatprep.subr.bf16.mxu0 0
    %1822 = vmatpush2.bf16.msra.mxu0 0
    %1823 = vmatprep.subr.bf16.mxu0 0
    %1824 = vmatpush2.bf16.msra.mxu0 0
    %1825 = vmatprep.subr.bf16.mxu0 0
    %1826 = vmatpush2.bf16.msra.mxu0 0
    %1827 = vmatprep.mubr.bf16.mxu0 0
    %1828 = vmatmul.mubr.bf16.gmra.mxu0 %v1673
    %v1829 = vpop.f32.mrf.mxu0
    %v1830 = vadd.f32 %v1790, %v1829
    %v1831 = vpop.f32.mrf.mxu0
    %v1832 = vpop.f32.mrf.mxu0
    %v1833 = vpop.f32.mrf.mxu0
    %1834 = vdwg.mxu0
    %v1835 = vmul.f32 %v1830, 0.01
    %v1836 = vmax.f32 %v1830, %v1835
    %v1837 = vpack.c.bf16 %v1836, %v1836
    %v1838 = vld [vmem:[%s8] sm:$0xff]
    %v1839 = vld [vmem:[%s8 + $0x8] sm:$0xff]
    %v1840 = vld [vmem:[%s8 + $0x10] sm:$0xff]
    %v1841 = vld [vmem:[%s8 + $0x18] sm:$0xff]
    %v1842 = vld [vmem:[%s8 + $0x20] sm:$0xff]
    %v1843 = vld [vmem:[%s8 + $0x28] sm:$0xff]
    %v1844 = vld [vmem:[%s8 + $0x30] sm:$0xff]
    %v1845 = vld [vmem:[%s8 + $0x38] sm:$0xff]
    %v1846 = vld [vmem:[%s8 + $0x40] sm:$0xff]
    %v1847 = vld [vmem:[%s8 + $0x48] sm:$0xff]
    %v1848 = vld [vmem:[%s8 + $0x50] sm:$0xff]
    %v1849 = vld [vmem:[%s8 + $0x58] sm:$0xff]
    %v1850 = vld [vmem:[%s8 + $0x60] sm:$0xff]
    %v1851 = vld [vmem:[%s8 + $0x68] sm:$0xff]
    %v1852 = vld [vmem:[%s8 + $0x70] sm:$0xff]
    %v1853 = vld [vmem:[%s8 + $0x78] sm:$0xff]
    %v1854 = vld [vmem:[%s9] sm:$0x3]
    %v1856 = vlaneseq
    %v1857 = vshrl.u32 %v1856, 7
    %v1858 = vsub.s32 0, %v1857
    %v1859 = vrot.slane %v1854, %v1858
    %v1860 = vlaneseq
    %v1861 = vshrl.u32 %v1860, 7
    %v1862 = vsub.s32 1, %v1861
    %v1863 = vrot.slane %v1854, %v1862
    %v1882 = vunpack.c.l.b16 %v1838
    %v1883 = vunpack.c.h.b16 %v1838
    %v1884 = vunpack.c.l.b16 %v1839
    %v1885 = vunpack.c.h.b16 %v1839
    %v1886 = vunpack.c.l.b16 %v1840
    %v1887 = vunpack.c.h.b16 %v1840
    %v1888 = vunpack.c.l.b16 %v1841
    %v1889 = vunpack.c.h.b16 %v1841
    %v1890 = vunpack.c.l.b16 %v1842
    %v1891 = vunpack.c.h.b16 %v1842
    %v1892 = vunpack.c.l.b16 %v1843
    %v1893 = vunpack.c.h.b16 %v1843
    %v1894 = vunpack.c.l.b16 %v1844
    %v1895 = vunpack.c.h.b16 %v1844
    %v1896 = vunpack.c.l.b16 %v1845
    %v1897 = vunpack.c.h.b16 %v1845
    %v1898 = vunpack.c.l.b16 %v1846
    %v1899 = vunpack.c.h.b16 %v1846
    %v1900 = vunpack.c.l.b16 %v1847
    %v1901 = vunpack.c.h.b16 %v1847
    %v1902 = vunpack.c.l.b16 %v1848
    %v1903 = vunpack.c.h.b16 %v1848
    %v1904 = vunpack.c.l.b16 %v1849
    %v1905 = vunpack.c.h.b16 %v1849
    %v1906 = vunpack.c.l.b16 %v1850
    %v1907 = vunpack.c.h.b16 %v1850
    %v1908 = vunpack.c.l.b16 %v1851
    %v1909 = vunpack.c.h.b16 %v1851
    %v1910 = vunpack.c.l.b16 %v1852
    %v1911 = vunpack.c.h.b16 %v1852
    %v1912 = vunpack.c.l.b16 %v1853
    %v1913 = vunpack.c.h.b16 %v1853
    %v1914 = vpack.c.b16 %v1884, %v1882
    %v1915 = vpack.c.b16 %v1885, %v1883
    %v1916 = vpack.c.b16 %v1888, %v1886
    %v1917 = vpack.c.b16 %v1889, %v1887
    %v1918 = vpack.c.b16 %v1892, %v1890
    %v1919 = vpack.c.b16 %v1893, %v1891
    %v1920 = vpack.c.b16 %v1896, %v1894
    %v1921 = vpack.c.b16 %v1897, %v1895
    %v1922 = vpack.c.b16 %v1900, %v1898
    %v1923 = vpack.c.b16 %v1901, %v1899
    %v1924 = vpack.c.b16 %v1904, %v1902
    %v1925 = vpack.c.b16 %v1905, %v1903
    %v1926 = vpack.c.b16 %v1908, %v1906
    %v1927 = vpack.c.b16 %v1909, %v1907
    %v1928 = vpack.c.b16 %v1912, %v1910
    %v1929 = vpack.c.b16 %v1913, %v1911
    %1946 = vmatprep.subr.bf16.mxu0 %v1929
    %1947 = vmatpush1.bf16.msra.mxu0 %v1928
    %1948 = vmatprep.subr.bf16.mxu0 %v1927
    %1949 = vmatpush1.bf16.msra.mxu0 %v1926
    %1950 = vmatprep.subr.bf16.mxu0 %v1925
    %1951 = vmatpush1.bf16.msra.mxu0 %v1924
    %1952 = vmatprep.subr.bf16.mxu0 %v1923
    %1953 = vmatpush1.bf16.msra.mxu0 %v1922
    %1954 = vmatprep.subr.bf16.mxu0 %v1921
    %1955 = vmatpush1.bf16.msra.mxu0 %v1920
    %1956 = vmatprep.subr.bf16.mxu0 %v1919
    %1957 = vmatpush1.bf16.msra.mxu0 %v1918
    %1958 = vmatprep.subr.bf16.mxu0 %v1917
    %1959 = vmatpush1.bf16.msra.mxu0 %v1916
    %1960 = vmatprep.subr.bf16.mxu0 %v1915
    %1961 = vmatpush1.bf16.msra.mxu0 %v1914
    %1962 = vmatprep.subr.bf16.mxu0 0
    %1963 = vmatpush2.bf16.msra.mxu0 0
    %1964 = vmatprep.subr.bf16.mxu0 0
    %1965 = vmatpush2.bf16.msra.mxu0 0
    %1966 = vmatprep.subr.bf16.mxu0 0
    %1967 = vmatpush2.bf16.msra.mxu0 0
    %1968 = vmatprep.subr.bf16.mxu0 0
    %1969 = vmatpush2.bf16.msra.mxu0 0
    %1970 = vmatprep.subr.bf16.mxu0 0
    %1971 = vmatpush2.bf16.msra.mxu0 0
    %1972 = vmatprep.subr.bf16.mxu0 0
    %1973 = vmatpush2.bf16.msra.mxu0 0
    %1974 = vmatprep.subr.bf16.mxu0 0
    %1975 = vmatpush2.bf16.msra.mxu0 0
    %1976 = vmatprep.subr.bf16.mxu0 0
    %1977 = vmatpush2.bf16.msra.mxu0 0
    %1978 = vmatprep.mubr.bf16.mxu0 0
    %1979 = vmatmul.mubr.bf16.gmra.mxu0 %v1837
    %v1980 = vpop.f32.mrf.mxu0
    %v1981 = vadd.f32 %v1859, %v1980
    %v1982 = vpop.f32.mrf.mxu0
    %v1983 = vadd.f32 %v1863, %v1982
    %v1984 = vpop.f32.mrf.mxu0
    %v1985 = vpop.f32.mrf.mxu0
    %1986 = vdwg.mxu0
    %v1987 = vmul.f32 %v1981, 0.01
    %v1988 = vmul.f32 %v1983, 0.01
    %v1989 = vmax.f32 %v1981, %v1987
    %v1990 = vmax.f32 %v1983, %v1988
    %v1991 = vpack.c.bf16 %v1989, %v1989
    %v1992 = vpack.c.bf16 %v1990, %v1990
    %v1993 = vld [vmem:[%s10] sm:$0xff]
    %v1994 = vld [vmem:[%s10 + $0x8] sm:$0xff]
    %v1995 = vld [vmem:[%s10 + $0x10] sm:$0xff]
    %v1996 = vld [vmem:[%s10 + $0x18] sm:$0xff]
    %v1997 = vld [vmem:[%s10 + $0x20] sm:$0xff]
    %v1998 = vld [vmem:[%s10 + $0x28] sm:$0xff]
    %v1999 = vld [vmem:[%s10 + $0x30] sm:$0xff]
    %v2000 = vld [vmem:[%s10 + $0x38] sm:$0xff]
    %v2001 = vld [vmem:[%s10 + $0x40] sm:$0xff]
    %v2002 = vld [vmem:[%s10 + $0x48] sm:$0xff]
    %v2003 = vld [vmem:[%s10 + $0x50] sm:$0xff]
    %v2004 = vld [vmem:[%s10 + $0x58] sm:$0xff]
    %v2005 = vld [vmem:[%s10 + $0x60] sm:$0xff]
    %v2006 = vld [vmem:[%s10 + $0x68] sm:$0xff]
    %v2007 = vld [vmem:[%s10 + $0x70] sm:$0xff]
    %v2008 = vld [vmem:[%s10 + $0x78] sm:$0xff]
    %v2009 = vld [vmem:[%s10 + $0x80] sm:$0xff]
    %v2010 = vld [vmem:[%s10 + $0x88] sm:$0xff]
    %v2011 = vld [vmem:[%s10 + $0x90] sm:$0xff]
    %v2012 = vld [vmem:[%s10 + $0x98] sm:$0xff]
    %v2013 = vld [vmem:[%s10 + $0xa0] sm:$0xff]
    %v2014 = vld [vmem:[%s10 + $0xa8] sm:$0xff]
    %v2015 = vld [vmem:[%s10 + $0xb0] sm:$0xff]
    %v2016 = vld [vmem:[%s10 + $0xb8] sm:$0xff]
    %v2017 = vld [vmem:[%s10 + $0xc0] sm:$0xff]
    %v2018 = vld [vmem:[%s10 + $0xc8] sm:$0xff]
    %v2019 = vld [vmem:[%s10 + $0xd0] sm:$0xff]
    %v2020 = vld [vmem:[%s10 + $0xd8] sm:$0xff]
    %v2021 = vld [vmem:[%s10 + $0xe0] sm:$0xff]
    %v2022 = vld [vmem:[%s10 + $0xe8] sm:$0xff]
    %v2023 = vld [vmem:[%s10 + $0xf0] sm:$0xff]
    %v2024 = vld [vmem:[%s10 + $0xf8] sm:$0xff]
    %v2025 = vld [vmem:[%s10 + $0x100] sm:$0xff]
    %v2026 = vld [vmem:[%s10 + $0x108] sm:$0xff]
    %v2027 = vld [vmem:[%s10 + $0x110] sm:$0xff]
    %v2028 = vld [vmem:[%s10 + $0x118] sm:$0xff]
    %v2029 = vld [vmem:[%s10 + $0x120] sm:$0xff]
    %v2030 = vld [vmem:[%s10 + $0x128] sm:$0xff]
    %v2031 = vld [vmem:[%s10 + $0x130] sm:$0xff]
    %v2032 = vld [vmem:[%s10 + $0x138] sm:$0xff]
    %v2033 = vld [vmem:[%s10 + $0x140] sm:$0xff]
    %v2034 = vld [vmem:[%s10 + $0x148] sm:$0xff]
    %v2035 = vld [vmem:[%s10 + $0x150] sm:$0xff]
    %v2036 = vld [vmem:[%s10 + $0x158] sm:$0xff]
    %v2037 = vld [vmem:[%s10 + $0x160] sm:$0xff]
    %v2038 = vld [vmem:[%s10 + $0x168] sm:$0xff]
    %v2039 = vld [vmem:[%s10 + $0x170] sm:$0xff]
    %v2040 = vld [vmem:[%s10 + $0x178] sm:$0xff]
    %v2041 = vld [vmem:[%s10 + $0x180] sm:$0xff]
    %v2042 = vld [vmem:[%s10 + $0x188] sm:$0xff]
    %v2043 = vld [vmem:[%s10 + $0x190] sm:$0xff]
    %v2044 = vld [vmem:[%s10 + $0x198] sm:$0xff]
    %v2045 = vld [vmem:[%s10 + $0x1a0] sm:$0xff]
    %v2046 = vld [vmem:[%s10 + $0x1a8] sm:$0xff]
    %v2047 = vld [vmem:[%s10 + $0x1b0] sm:$0xff]
    %v2048 = vld [vmem:[%s10 + $0x1b8] sm:$0xff]
    %v2049 = vld [vmem:[%s10 + $0x1c0] sm:$0xff]
    %v2050 = vld [vmem:[%s10 + $0x1c8] sm:$0xff]
    %v2051 = vld [vmem:[%s10 + $0x1d0] sm:$0xff]
    %v2052 = vld [vmem:[%s10 + $0x1d8] sm:$0xff]
    %v2053 = vld [vmem:[%s10 + $0x1e0] sm:$0xff]
    %v2054 = vld [vmem:[%s10 + $0x1e8] sm:$0xff]
    %v2055 = vld [vmem:[%s10 + $0x1f0] sm:$0xff]
    %v2056 = vld [vmem:[%s10 + $0x1f8] sm:$0xff]
    %v2057 = vld [vmem:[%s11] sm:$0xf]
    %v2059 = vlaneseq
    %v2060 = vshrl.u32 %v2059, 7
    %v2061 = vsub.s32 0, %v2060
    %v2062 = vrot.slane %v2057, %v2061
    %v2063 = vlaneseq
    %v2064 = vshrl.u32 %v2063, 7
    %v2065 = vsub.s32 1, %v2064
    %v2066 = vrot.slane %v2057, %v2065
    %v2067 = vlaneseq
    %v2068 = vshrl.u32 %v2067, 7
    %v2069 = vsub.s32 2, %v2068
    %v2070 = vrot.slane %v2057, %v2069
    %v2071 = vlaneseq
    %v2072 = vshrl.u32 %v2071, 7
    %v2073 = vsub.s32 3, %v2072
    %v2074 = vrot.slane %v2057, %v2073
    %v2143 = vunpack.c.l.b16 %v1993
    %v2144 = vunpack.c.h.b16 %v1993
    %v2145 = vunpack.c.l.b16 %v1994
    %v2146 = vunpack.c.h.b16 %v1994
    %v2147 = vunpack.c.l.b16 %v1995
    %v2148 = vunpack.c.h.b16 %v1995
    %v2149 = vunpack.c.l.b16 %v1996
    %v2150 = vunpack.c.h.b16 %v1996
    %v2151 = vunpack.c.l.b16 %v1997
    %v2152 = vunpack.c.h.b16 %v1997
    %v2153 = vunpack.c.l.b16 %v1998
    %v2154 = vunpack.c.h.b16 %v1998
    %v2155 = vunpack.c.l.b16 %v1999
    %v2156 = vunpack.c.h.b16 %v1999
    %v2157 = vunpack.c.l.b16 %v2000
    %v2158 = vunpack.c.h.b16 %v2000
    %v2159 = vunpack.c.l.b16 %v2001
    %v2160 = vunpack.c.h.b16 %v2001
    %v2161 = vunpack.c.l.b16 %v2002
    %v2162 = vunpack.c.h.b16 %v2002
    %v2163 = vunpack.c.l.b16 %v2003
    %v2164 = vunpack.c.h.b16 %v2003
    %v2165 = vunpack.c.l.b16 %v2004
    %v2166 = vunpack.c.h.b16 %v2004
    %v2167 = vunpack.c.l.b16 %v2005
    %v2168 = vunpack.c.h.b16 %v2005
    %v2169 = vunpack.c.l.b16 %v2006
    %v2170 = vunpack.c.h.b16 %v2006
    %v2171 = vunpack.c.l.b16 %v2007
    %v2172 = vunpack.c.h.b16 %v2007
    %v2173 = vunpack.c.l.b16 %v2008
    %v2174 = vunpack.c.h.b16 %v2008
    %v2175 = vunpack.c.l.b16 %v2009
    %v2176 = vunpack.c.h.b16 %v2009
    %v2177 = vunpack.c.l.b16 %v2010
    %v2178 = vunpack.c.h.b16 %v2010
    %v2179 = vunpack.c.l.b16 %v2011
    %v2180 = vunpack.c.h.b16 %v2011
    %v2181 = vunpack.c.l.b16 %v2012
    %v2182 = vunpack.c.h.b16 %v2012
    %v2183 = vunpack.c.l.b16 %v2013
    %v2184 = vunpack.c.h.b16 %v2013
    %v2185 = vunpack.c.l.b16 %v2014
    %v2186 = vunpack.c.h.b16 %v2014
    %v2187 = vunpack.c.l.b16 %v2015
    %v2188 = vunpack.c.h.b16 %v2015
    %v2189 = vunpack.c.l.b16 %v2016
    %v2190 = vunpack.c.h.b16 %v2016
    %v2191 = vunpack.c.l.b16 %v2017
    %v2192 = vunpack.c.h.b16 %v2017
    %v2193 = vunpack.c.l.b16 %v2018
    %v2194 = vunpack.c.h.b16 %v2018
    %v2195 = vunpack.c.l.b16 %v2019
    %v2196 = vunpack.c.h.b16 %v2019
    %v2197 = vunpack.c.l.b16 %v2020
    %v2198 = vunpack.c.h.b16 %v2020
    %v2199 = vunpack.c.l.b16 %v2021
    %v2200 = vunpack.c.h.b16 %v2021
    %v2201 = vunpack.c.l.b16 %v2022
    %v2202 = vunpack.c.h.b16 %v2022
    %v2203 = vunpack.c.l.b16 %v2023
    %v2204 = vunpack.c.h.b16 %v2023
    %v2205 = vunpack.c.l.b16 %v2024
    %v2206 = vunpack.c.h.b16 %v2024
    %v2207 = vunpack.c.l.b16 %v2025
    %v2208 = vunpack.c.h.b16 %v2025
    %v2209 = vunpack.c.l.b16 %v2026
    %v2210 = vunpack.c.h.b16 %v2026
    %v2211 = vunpack.c.l.b16 %v2027
    %v2212 = vunpack.c.h.b16 %v2027
    %v2213 = vunpack.c.l.b16 %v2028
    %v2214 = vunpack.c.h.b16 %v2028
    %v2215 = vunpack.c.l.b16 %v2029
    %v2216 = vunpack.c.h.b16 %v2029
    %v2217 = vunpack.c.l.b16 %v2030
    %v2218 = vunpack.c.h.b16 %v2030
    %v2219 = vunpack.c.l.b16 %v2031
    %v2220 = vunpack.c.h.b16 %v2031
    %v2221 = vunpack.c.l.b16 %v2032
    %v2222 = vunpack.c.h.b16 %v2032
    %v2223 = vunpack.c.l.b16 %v2033
    %v2224 = vunpack.c.h.b16 %v2033
    %v2225 = vunpack.c.l.b16 %v2034
    %v2226 = vunpack.c.h.b16 %v2034
    %v2227 = vunpack.c.l.b16 %v2035
    %v2228 = vunpack.c.h.b16 %v2035
    %v2229 = vunpack.c.l.b16 %v2036
    %v2230 = vunpack.c.h.b16 %v2036
    %v2231 = vunpack.c.l.b16 %v2037
    %v2232 = vunpack.c.h.b16 %v2037
    %v2233 = vunpack.c.l.b16 %v2038
    %v2234 = vunpack.c.h.b16 %v2038
    %v2235 = vunpack.c.l.b16 %v2039
    %v2236 = vunpack.c.h.b16 %v2039
    %v2237 = vunpack.c.l.b16 %v2040
    %v2238 = vunpack.c.h.b16 %v2040
    %v2239 = vunpack.c.l.b16 %v2041
    %v2240 = vunpack.c.h.b16 %v2041
    %v2241 = vunpack.c.l.b16 %v2042
    %v2242 = vunpack.c.h.b16 %v2042
    %v2243 = vunpack.c.l.b16 %v2043
    %v2244 = vunpack.c.h.b16 %v2043
    %v2245 = vunpack.c.l.b16 %v2044
    %v2246 = vunpack.c.h.b16 %v2044
    %v2247 = vunpack.c.l.b16 %v2045
    %v2248 = vunpack.c.h.b16 %v2045
    %v2249 = vunpack.c.l.b16 %v2046
    %v2250 = vunpack.c.h.b16 %v2046
    %v2251 = vunpack.c.l.b16 %v2047
    %v2252 = vunpack.c.h.b16 %v2047
    %v2253 = vunpack.c.l.b16 %v2048
    %v2254 = vunpack.c.h.b16 %v2048
    %v2255 = vunpack.c.l.b16 %v2049
    %v2256 = vunpack.c.h.b16 %v2049
    %v2257 = vunpack.c.l.b16 %v2050
    %v2258 = vunpack.c.h.b16 %v2050
    %v2259 = vunpack.c.l.b16 %v2051
    %v2260 = vunpack.c.h.b16 %v2051
    %v2261 = vunpack.c.l.b16 %v2052
    %v2262 = vunpack.c.h.b16 %v2052
    %v2263 = vunpack.c.l.b16 %v2053
    %v2264 = vunpack.c.h.b16 %v2053
    %v2265 = vunpack.c.l.b16 %v2054
    %v2266 = vunpack.c.h.b16 %v2054
    %v2267 = vunpack.c.l.b16 %v2055
    %v2268 = vunpack.c.h.b16 %v2055
    %v2269 = vunpack.c.l.b16 %v2056
    %v2270 = vunpack.c.h.b16 %v2056
    %v2271 = vpack.c.b16 %v2147, %v2143
    %v2272 = vpack.c.b16 %v2148, %v2144
    %v2273 = vpack.c.b16 %v2149, %v2145
    %v2274 = vpack.c.b16 %v2150, %v2146
    %v2275 = vpack.c.b16 %v2155, %v2151
    %v2276 = vpack.c.b16 %v2156, %v2152
    %v2277 = vpack.c.b16 %v2157, %v2153
    %v2278 = vpack.c.b16 %v2158, %v2154
    %v2279 = vpack.c.b16 %v2163, %v2159
    %v2280 = vpack.c.b16 %v2164, %v2160
    %v2281 = vpack.c.b16 %v2165, %v2161
    %v2282 = vpack.c.b16 %v2166, %v2162
    %v2283 = vpack.c.b16 %v2171, %v2167
    %v2284 = vpack.c.b16 %v2172, %v2168
    %v2285 = vpack.c.b16 %v2173, %v2169
    %v2286 = vpack.c.b16 %v2174, %v2170
    %v2287 = vpack.c.b16 %v2179, %v2175
    %v2288 = vpack.c.b16 %v2180, %v2176
    %v2289 = vpack.c.b16 %v2181, %v2177
    %v2290 = vpack.c.b16 %v2182, %v2178
    %v2291 = vpack.c.b16 %v2187, %v2183
    %v2292 = vpack.c.b16 %v2188, %v2184
    %v2293 = vpack.c.b16 %v2189, %v2185
    %v2294 = vpack.c.b16 %v2190, %v2186
    %v2295 = vpack.c.b16 %v2195, %v2191
    %v2296 = vpack.c.b16 %v2196, %v2192
    %v2297 = vpack.c.b16 %v2197, %v2193
    %v2298 = vpack.c.b16 %v2198, %v2194
    %v2299 = vpack.c.b16 %v2203, %v2199
    %v2300 = vpack.c.b16 %v2204, %v2200
    %v2301 = vpack.c.b16 %v2205, %v2201
    %v2302 = vpack.c.b16 %v2206, %v2202
    %v2303 = vpack.c.b16 %v2211, %v2207
    %v2304 = vpack.c.b16 %v2212, %v2208
    %v2305 = vpack.c.b16 %v2213, %v2209
    %v2306 = vpack.c.b16 %v2214, %v2210
    %v2307 = vpack.c.b16 %v2219, %v2215
    %v2308 = vpack.c.b16 %v2220, %v2216
    %v2309 = vpack.c.b16 %v2221, %v2217
    %v2310 = vpack.c.b16 %v2222, %v2218
    %v2311 = vpack.c.b16 %v2227, %v2223
    %v2312 = vpack.c.b16 %v2228, %v2224
    %v2313 = vpack.c.b16 %v2229, %v2225
    %v2314 = vpack.c.b16 %v2230, %v2226
    %v2315 = vpack.c.b16 %v2235, %v2231
    %v2316 = vpack.c.b16 %v2236, %v2232
    %v2317 = vpack.c.b16 %v2237, %v2233
    %v2318 = vpack.c.b16 %v2238, %v2234
    %v2319 = vpack.c.b16 %v2243, %v2239
    %v2320 = vpack.c.b16 %v2244, %v2240
    %v2321 = vpack.c.b16 %v2245, %v2241
    %v2322 = vpack.c.b16 %v2246, %v2242
    %v2323 = vpack.c.b16 %v2251, %v2247
    %v2324 = vpack.c.b16 %v2252, %v2248
    %v2325 = vpack.c.b16 %v2253, %v2249
    %v2326 = vpack.c.b16 %v2254, %v2250
    %v2327 = vpack.c.b16 %v2259, %v2255
    %v2328 = vpack.c.b16 %v2260, %v2256
    %v2329 = vpack.c.b16 %v2261, %v2257
    %v2330 = vpack.c.b16 %v2262, %v2258
    %v2331 = vpack.c.b16 %v2267, %v2263
    %v2332 = vpack.c.b16 %v2268, %v2264
    %v2333 = vpack.c.b16 %v2269, %v2265
    %v2334 = vpack.c.b16 %v2270, %v2266
    %2399 = vmatprep.subr.bf16.mxu0 %v2300
    %2400 = vmatpush1.bf16.msra.mxu0 %v2299
    %2401 = vmatprep.subr.bf16.mxu0 %v2296
    %2402 = vmatpush1.bf16.msra.mxu0 %v2295
    %2403 = vmatprep.subr.bf16.mxu0 %v2292
    %2404 = vmatpush1.bf16.msra.mxu0 %v2291
    %2405 = vmatprep.subr.bf16.mxu0 %v2288
    %2406 = vmatpush1.bf16.msra.mxu0 %v2287
    %2407 = vmatprep.subr.bf16.mxu0 %v2284
    %2408 = vmatpush1.bf16.msra.mxu0 %v2283
    %2409 = vmatprep.subr.bf16.mxu0 %v2280
    %2410 = vmatpush1.bf16.msra.mxu0 %v2279
    %2411 = vmatprep.subr.bf16.mxu0 %v2276
    %2412 = vmatpush1.bf16.msra.mxu0 %v2275
    %2413 = vmatprep.subr.bf16.mxu0 %v2272
    %2414 = vmatpush1.bf16.msra.mxu0 %v2271
    %2415 = vmatprep.subr.bf16.mxu0 %v2332
    %2416 = vmatpush2.bf16.msra.mxu0 %v2331
    %2417 = vmatprep.subr.bf16.mxu0 %v2328
    %2418 = vmatpush2.bf16.msra.mxu0 %v2327
    %2419 = vmatprep.subr.bf16.mxu0 %v2324
    %2420 = vmatpush2.bf16.msra.mxu0 %v2323
    %2421 = vmatprep.subr.bf16.mxu0 %v2320
    %2422 = vmatpush2.bf16.msra.mxu0 %v2319
    %2423 = vmatprep.subr.bf16.mxu0 %v2316
    %2424 = vmatpush2.bf16.msra.mxu0 %v2315
    %2425 = vmatprep.subr.bf16.mxu0 %v2312
    %2426 = vmatpush2.bf16.msra.mxu0 %v2311
    %2427 = vmatprep.subr.bf16.mxu0 %v2308
    %2428 = vmatpush2.bf16.msra.mxu0 %v2307
    %2429 = vmatprep.subr.bf16.mxu0 %v2304
    %2430 = vmatpush2.bf16.msra.mxu0 %v2303
    %2431 = vmatprep.mubr.bf16.mxu0 %v1992
    %2432 = vmatmul.mubr.bf16.gmra.mxu0 %v1991
    %v2433 = vpop.f32.mrf.mxu0
    %v2434 = vadd.f32 %v2062, %v2433
    %v2435 = vpop.f32.mrf.mxu0
    %v2436 = vadd.f32 %v2066, %v2435
    %v2437 = vpop.f32.mrf.mxu0
    %v2438 = vpop.f32.mrf.mxu0
    %2439 = vdwg.mxu0
    %2440 = vmatprep.subr.bf16.mxu0 %v2302
    %2441 = vmatpush1.bf16.msra.mxu0 %v2301
    %2442 = vmatprep.subr.bf16.mxu0 %v2298
    %2443 = vmatpush1.bf16.msra.mxu0 %v2297
    %2444 = vmatprep.subr.bf16.mxu0 %v2294
    %2445 = vmatpush1.bf16.msra.mxu0 %v2293
    %2446 = vmatprep.subr.bf16.mxu0 %v2290
    %2447 = vmatpush1.bf16.msra.mxu0 %v2289
    %2448 = vmatprep.subr.bf16.mxu0 %v2286
    %2449 = vmatpush1.bf16.msra.mxu0 %v2285
    %2450 = vmatprep.subr.bf16.mxu0 %v2282
    %2451 = vmatpush1.bf16.msra.mxu0 %v2281
    %2452 = vmatprep.subr.bf16.mxu0 %v2278
    %2453 = vmatpush1.bf16.msra.mxu0 %v2277
    %2454 = vmatprep.subr.bf16.mxu0 %v2274
    %2455 = vmatpush1.bf16.msra.mxu0 %v2273
    %2456 = vmatprep.subr.bf16.mxu0 %v2334
    %2457 = vmatpush2.bf16.msra.mxu0 %v2333
    %2458 = vmatprep.subr.bf16.mxu0 %v2330
    %2459 = vmatpush2.bf16.msra.mxu0 %v2329
    %2460 = vmatprep.subr.bf16.mxu0 %v2326
    %2461 = vmatpush2.bf16.msra.mxu0 %v2325
    %2462 = vmatprep.subr.bf16.mxu0 %v2322
    %2463 = vmatpush2.bf16.msra.mxu0 %v2321
    %2464 = vmatprep.subr.bf16.mxu0 %v2318
    %2465 = vmatpush2.bf16.msra.mxu0 %v2317
    %2466 = vmatprep.subr.bf16.mxu0 %v2314
    %2467 = vmatpush2.bf16.msra.mxu0 %v2313
    %2468 = vmatprep.subr.bf16.mxu0 %v2310
    %2469 = vmatpush2.bf16.msra.mxu0 %v2309
    %2470 = vmatprep.subr.bf16.mxu0 %v2306
    %2471 = vmatpush2.bf16.msra.mxu0 %v2305
    %2472 = vmatprep.mubr.bf16.mxu0 %v1992
    %2473 = vmatmul.mubr.bf16.gmra.mxu0 %v1991
    %v2474 = vpop.f32.mrf.mxu0
    %v2475 = vadd.f32 %v2070, %v2474
    %v2476 = vpop.f32.mrf.mxu0
    %v2477 = vadd.f32 %v2074, %v2476
    %v2478 = vpop.f32.mrf.mxu0
    %v2479 = vpop.f32.mrf.mxu0
    %2480 = vdwg.mxu0
    %v2481 = vmul.f32 %v2434, 0.01
    %v2482 = vmul.f32 %v2436, 0.01
    %v2483 = vmul.f32 %v2475, 0.01
    %v2484 = vmul.f32 %v2477, 0.01
    %v2485 = vmax.f32 %v2434, %v2481
    %v2486 = vmax.f32 %v2436, %v2482
    %v2487 = vmax.f32 %v2475, %v2483
    %v2488 = vmax.f32 %v2477, %v2484
    %v2489 = vld [vmem:[%s12] sm:$0x3]
    %v2490 = vld [vmem:[%s13] sm:$0xf]
    %v2491 = vld [vmem:[%s14] sm:$0x1]
    %v2493 = vlaneseq
    %v2494 = vshrl.u32 %v2493, 7
    %v2495 = vsub.s32 0, %v2494
    %v2496 = vrot.slane %v2491, %v2495
    %vm2498 = vcmask 31744
    %v2500 = vsel %vm2498, %v2489, 0
    %vm2502 = vcmask 1043456
    %v2504 = vsel %vm2502, %v2490, 0
    %2506 = vmatprep.subr.mxu0 0.0
    %2507 = vmatpush1.msra.mxu0 0.0
    %2508 = vmatprep.subr.mxu0 0.0
    %2509 = vmatpush1.msra.mxu0 0.0
    %2510 = vmatprep.subr.mxu0 0.0
    %2511 = vmatpush1.msra.mxu0 0.0
    %2512 = vmatprep.subr.mxu0 0.0
    %2513 = vmatpush1.msra.mxu0 0.0
    %2514 = vmatprep.subr.mxu0 0.0
    %2515 = vmatpush1.msra.mxu0 0.0
    %2516 = vmatprep.subr.mxu0 0.0
    %2517 = vmatpush1.msra.mxu0 0.0
    %2518 = vmatprep.subr.mxu0 0.0
    %2519 = vmatpush1.msra.mxu0 0.0
    %2520 = vmatprep.subr.mxu0 0.0
    %2521 = vmatpush1.msra.mxu0 0.0
    %2522 = vmatprep.subr.mxu0 0.0
    %2523 = vmatpush1.msra.mxu0 0.0
    %2524 = vmatprep.subr.mxu0 0.0
    %2525 = vmatpush1.msra.mxu0 0.0
    %2526 = vmatprep.subr.mxu0 0.0
    %2527 = vmatpush1.msra.mxu0 0.0
    %2528 = vmatprep.subr.mxu0 0.0
    %2529 = vmatpush1.msra.mxu0 0.0
    %2530 = vmatprep.subr.mxu0 0.0
    %2531 = vmatpush1.msra.mxu0 0.0
    %2532 = vmatprep.subr.mxu0 0.0
    %2533 = vmatpush1.msra.mxu0 0.0
    %2534 = vmatprep.subr.mxu0 0.0
    %2535 = vmatpush1.msra.mxu0 0.0
    %2536 = vmatprep.subr.mxu0 0.0
    %2537 = vmatpush1.msra.mxu0 %v2504
    %2538 = vmatprep.subr.mxu0 0.0
    %2539 = vmatpush2.msra.mxu0 0.0
    %2540 = vmatprep.subr.mxu0 0.0
    %2541 = vmatpush2.msra.mxu0 0.0
    %2542 = vmatprep.subr.mxu0 0.0
    %2543 = vmatpush2.msra.mxu0 0.0
    %2544 = vmatprep.subr.mxu0 0.0
    %2545 = vmatpush2.msra.mxu0 0.0
    %2546 = vmatprep.subr.mxu0 0.0
    %2547 = vmatpush2.msra.mxu0 0.0
    %2548 = vmatprep.subr.mxu0 0.0
    %2549 = vmatpush2.msra.mxu0 0.0
    %2550 = vmatprep.subr.mxu0 0.0
    %2551 = vmatpush2.msra.mxu0 0.0
    %2552 = vmatprep.subr.mxu0 0.0
    %2553 = vmatpush2.msra.mxu0 0.0
    %2554 = vmatprep.subr.mxu0 0.0
    %2555 = vmatpush2.msra.mxu0 0.0
    %2556 = vmatprep.subr.mxu0 0.0
    %2557 = vmatpush2.msra.mxu0 0.0
    %2558 = vmatprep.subr.mxu0 0.0
    %2559 = vmatpush2.msra.mxu0 0.0
    %2560 = vmatprep.subr.mxu0 0.0
    %2561 = vmatpush2.msra.mxu0 0.0
    %2562 = vmatprep.subr.mxu0 0.0
    %2563 = vmatpush2.msra.mxu0 0.0
    %2564 = vmatprep.subr.mxu0 0.0
    %2565 = vmatpush2.msra.mxu0 0.0
    %2566 = vmatprep.subr.mxu0 0.0
    %2567 = vmatpush2.msra.mxu0 0.0
    %2568 = vmatprep.subr.mxu0 0.0
    %2569 = vmatpush2.msra.mxu0 0.0
    %2570 = vmatprep.mubr.f32.mxu0 0.0
    %2571 = vmatmul.mubr.f32.gmra.mxu0 %v2500
    %v2572 = vpop.f32.mrf.mxu0
    %v2573 = vadd.f32 %v2496, %v2572
    %v2574 = vpop.f32.mrf.mxu0
    %2575 = vdwg.mxu0
    %v2580 = vcombine.low %v2485, %v2486
    %v2581 = vcombine.low %v2487, %v2488
    %v2583 = vunpack.c.l.s4 1983009808
    %v2584 = vunpack.c.0.s8 %v2583
    %v2585 = vlaneseq
    %v2586 = vshrl.u32 %v2585, 7
    %v2587 = vsub.s32 %v2584, %v2586
    %v2588 = vrot.slane %v2580, %v2587
    %v2590 = vunpack.c.l.s4 1983009808
    %v2591 = vunpack.c.0.s8 %v2590
    %v2592 = vlaneseq
    %v2593 = vshrl.u32 %v2592, 7
    %v2594 = vsub.s32 %v2591, %v2593
    %v2595 = vrot.slane %v2581, %v2594
    %v2596 = vcombine.low %v2588, %v2595
    %2598 = vst [vmem:[#allocation2] sm:$0xff] %v2596
    %vm2599 = vcmask 517120
    %2600 = vst.msk [vmem:[#allocation2 + $0x8] sm:$0x3] %vm2599, %v2573
    // Predicated region
    $region62: #{common_forward.1} parent=1 // pred_check
      _
    $region63: #{common_forward.1} parent=1 // pred_check_branch
      %2602 = sbr.rel (0) target = $region65
    $region64: #{common_forward.1} parent=1 // pred_region
      %s2604 = ssub.s32 160, 160
      %2605 = vsyncadd [#allocation3], %s2604
      %s2607 = sshll.u32 [#allocation2], 4
      %s2608 = int_to_ptr.vmem [resolvable:$true] %s2607
      %2610 = dma.vmem_to_hbm [thread:$0]  %s2608, 160, %s15, [#allocation3]
    $region65: #{common_forward.1} parent=1 // pred_fallthru
      _
    // Predicated region
    $region66: #{common_forward.1} parent=1 // pred_check
      _
    $region67: #{common_forward.1} parent=1 // pred_check_branch
      %2612 = sbr.rel (0) target = $region69
    $region68: #{common_forward.1} parent=1 // pred_region
      %2613 = dma.done [#allocation3], 160
    $region69: #{common_forward.1} parent=1 // pred_fallthru
      _
    %2614 = vsyncpa [#allocation3], 1

</llo_original>
